<compile_context>
chip_gen: v6e
topology: v6e:2x2x1
jax: 0.10.0
libtpu: 0.0.40
codegen_flags: <defaults>
</compile_context>

<pallas_src>
import numpy as np
import jax
import jax.numpy as jnp
from jax import lax
from jax.experimental import pallas as pl
from jax.experimental.pallas import tpu as pltpu


def _round_up(x, m):
    return (x + m - 1) // m * m


def _vmem_limit_bytes():
    # v5e/v6e: 128 MiB physical VMEM per TensorCore, v7x: 64 MiB.
    # Use ~3/4 of physical capped at 100 MiB; conservative fallback below v7x's 64 MiB.
    try:
        cap = int(pltpu.get_tpu_info().vmem_capacity_bytes)
    except Exception:
        cap = 64 * 1024 * 1024
    return int(min(cap * 3 // 4, 100 * 1024 * 1024))


# ---------------------------------------------------------------------------
# Fused single-call kernel (small graphs: everything resident in VMEM).
# ---------------------------------------------------------------------------
def lgcn_fused_kernel(h_ref, wcat_ref, a_src_ref, a_dst_ref, a_bias_ref,
                      indeg_ref, norm_ref, adj_ref, out_ref):
    dp = out_ref.shape[-1]
    hf = h_ref[...]                                                    # f32 [Np, Dp]
    # One fused MXU matmul: cat = h @ [w_rel | w_loop | w_evo]  (bf16 operands, f32 acc)
    cat = jnp.dot(hf.astype(jnp.bfloat16), wcat_ref[...],
                  preferred_element_type=jnp.float32)                  # [Np, 3Dp]
    msg = cat[:, 0:dp].astype(jnp.bfloat16)                            # source-side message
    loop = jnp.where(indeg_ref[...] > 0.0, cat[:, dp:2 * dp], cat[:, 2 * dp:3 * dp])
    # LineAtt halves in f32.  s_src produced directly in lane-dense row layout via a
    # small matmul contracting the feature axis (a_src is padded to 8 sublanes, row 0 real).
    s_src = lax.dot_general(a_src_ref[...], hf, (((1,), (1,)), ((), ())),
                            preferred_element_type=jnp.float32)[0:1, :]        # [1, Np]
    s_dst = jnp.sum(hf * a_dst_ref[0:1, :], axis=-1, keepdims=True) + a_bias_ref[...]  # [Np, 1]
    logits = s_dst + s_src                                             # [Np, Np] f32
    # sigmoid(relu(x)) == 0.5 + 0.5*tanh(0.5*relu(x)) : single EUP op per element.
    p = 0.5 + 0.5 * jnp.tanh(0.5 * jnp.maximum(logits, 0.0))
    atten = jnp.where(adj_ref[...] != 0, p, 0.0).astype(jnp.bfloat16)  # int8 adjacency mask
    feat = jnp.dot(atten, msg, preferred_element_type=jnp.float32) * norm_ref[...]
    out_ref[...] = jnp.tanh(feat + loop)


# ---------------------------------------------------------------------------
# Kernel 1 (tiled path): per-node source-side precompute, tiled over node rows.
# ---------------------------------------------------------------------------
def lgcn_node_kernel(h_ref, wcat_ref, a_src_ref, a_dst_ref, a_bias_ref, indeg_ref,
                     msg_ref, loop_ref, s_src_ref, s_dst_ref):
    dp = msg_ref.shape[-1]
    hf = h_ref[...]                                                    # f32 [TN, Dp]
    cat = jnp.dot(hf.astype(jnp.bfloat16), wcat_ref[...],
                  preferred_element_type=jnp.float32)                  # [TN, 3Dp]
    msg_ref[...] = cat[:, 0:dp].astype(msg_ref.dtype)                  # bf16
    loop = jnp.where(indeg_ref[...] > 0.0, cat[:, dp:2 * dp], cat[:, 2 * dp:3 * dp])
    loop_ref[...] = loop.astype(loop_ref.dtype)                        # bf16
    # s_src in lane-dense [1, TN] row layout (no masked vst, no wrapper transpose).
    srow = lax.dot_general(a_src_ref[...], hf, (((1,), (1,)), ((), ())),
                           preferred_element_type=jnp.float32)         # [8, TN]
    s_src_ref[...] = srow[0:1, :]
    s_dst_ref[...] = jnp.sum(hf * a_dst_ref[0:1, :], axis=-1, keepdims=True) + a_bias_ref[...]


# ---------------------------------------------------------------------------
# Kernel 2 (tiled path): attention + aggregation, grid = (dst tiles, src tiles).
#   logits[d, s] = s_dst[d] + s_src[s]
#   atten        = sigmoid(relu(logits)) masked by the int8 adjacency
#   acc         += atten @ msg            (f32 VMEM accumulator over src tiles, axis last)
#   out          = tanh(acc * norm + loop)   on the last src tile
# ---------------------------------------------------------------------------
def lgcn_agg_kernel(adj_ref, s_dst_ref, s_src_ref, msg_ref, norm_ref, loop_ref,
                    out_ref, acc_ref):
    @pl.when(pl.program_id(1) == 0)
    def _():
        acc_ref[...] = jnp.zeros_like(acc_ref)

    logits = s_dst_ref[...] + s_src_ref[...]                           # [TD, TS] f32
    p = 0.5 + 0.5 * jnp.tanh(0.5 * jnp.maximum(logits, 0.0))           # sigmoid(relu(.))
    atten = jnp.where(adj_ref[...] != 0, p, 0.0).astype(jnp.bfloat16)  # f32 mask, one cast
    acc_ref[...] += jnp.dot(atten, msg_ref[...],
                            preferred_element_type=jnp.float32)        # [TD, Dp] f32

    @pl.when(pl.program_id(1) == pl.num_programs(1) - 1)
    def _():
        out_ref[...] = jnp.tanh(acc_ref[...] * norm_ref[...] + loop_ref[...].astype(jnp.float32))


def lgcn_forward(h, adj, norm, indeg_mask, w_rel, w_loop, w_evo, a_src, a_dst, a_bias,
                 *, tile_n=512, force_tiled=False):
    N, D = h.shape
    f32, bf16 = jnp.float32, jnp.bfloat16

    Dp = _round_up(D, 128)                        # lane-dense feature dim
    Nmin = _round_up(N, 128)
    # Fused path when the whole padded problem comfortably fits VMEM (demo sizes).
    fused = (not force_tiled) and (Nmin <= 1024) and (Dp <= 256)
    TN = Nmin if fused else max(128, min(_round_up(tile_n, 128), Nmin))
    TS = TN
    Np = _round_up(N, TN)

    vmem_limit = _vmem_limit_bytes()

    # ---- wrapper-side padding / packing (layout plumbing only, exact math) ----
    hp = jnp.pad(h.astype(f32), ((0, Np - N), (0, Dp - D)))                       # f32
    adj_p = jnp.pad((adj != 0).astype(jnp.int8), ((0, Np - N), (0, Np - N)))      # int8 mask
    norm_p = jnp.pad(norm.astype(f32), ((0, Np - N), (0, 0)))
    indeg_p = jnp.pad(indeg_mask.astype(f32), ((0, Np - N), (0, 0)))

    # Fused weight [w_rel | w_loop | w_evo]; in-kernel select (no bf16 delta cancellation).
    wcat = jnp.zeros((Dp, 3 * Dp), f32)
    wcat = wcat.at[:D, 0:D].set(w_rel.astype(f32))
    wcat = wcat.at[:D, Dp:Dp + D].set(w_loop.astype(f32))
    wcat = wcat.at[:D, 2 * Dp:2 * Dp + D].set(w_evo.astype(f32))
    wcat = wcat.astype(bf16)

    # LineAtt halves, padded to 8 sublanes (row 0 holds the real vector).
    a_src_p = jnp.zeros((8, Dp), f32).at[0, :D].set(a_src.reshape(-1).astype(f32))
    a_dst_p = jnp.zeros((8, Dp), f32).at[0, :D].set(a_dst.reshape(-1).astype(f32))
    a_bias_f = a_bias.astype(f32).reshape(1, 1)

    if fused:
        cost = pl.CostEstimate(
            flops=int(2 * Np * Dp * 3 * Dp + 2 * Np * Np * Dp + 12 * Np * Np),
            transcendentals=int(Np * Np + Np * Dp),
            bytes_accessed=int(4 * Np * Dp + 2 * Dp * 3 * Dp + Np * Np
                               + 4 * Np * Dp + 16 * Np))
        out_pad = pl.pallas_call(
            lgcn_fused_kernel,
            out_shape=jax.ShapeDtypeStruct((Np, Dp), f32),
            grid=(1,),
            in_specs=[pl.BlockSpec((Np, Dp), lambda i: (0, 0)),
                      pl.BlockSpec((Dp, 3 * Dp), lambda i: (0, 0)),
                      pl.BlockSpec((8, Dp), lambda i: (0, 0)),
                      pl.BlockSpec((8, Dp), lambda i: (0, 0)),
                      pl.BlockSpec((1, 1), lambda i: (0, 0)),
                      pl.BlockSpec((Np, 1), lambda i: (0, 0)),
                      pl.BlockSpec((Np, 1), lambda i: (0, 0)),
                      pl.BlockSpec((Np, Np), lambda i: (0, 0))],
            out_specs=pl.BlockSpec((Np, Dp), lambda i: (0, 0)),
            compiler_params=pltpu.CompilerParams(
                dimension_semantics=("arbitrary",),
                vmem_limit_bytes=vmem_limit),
            cost_estimate=cost,
        )(hp, wcat, a_src_p, a_dst_p, a_bias_f, indeg_p, norm_p, adj_p)
        return out_pad[:N, :D]

    # ---- tiled path, kernel 1: source-side precompute (done once, not per dst tile) ----
    node_cost = pl.CostEstimate(
        flops=int(2 * Np * Dp * 3 * Dp + 16 * Np * Dp + 3 * Np * Dp),
        transcendentals=0,
        bytes_accessed=int(4 * Np * Dp + 2 * Dp * 3 * Dp + 2 * (2 * Np * Dp) + 16 * Np))
    msg, loop, s_src, s_dst = pl.pallas_call(
        lgcn_node_kernel,
        out_shape=(jax.ShapeDtypeStruct((Np, Dp), bf16),     # msg
                   jax.ShapeDtypeStruct((Np, Dp), bf16),     # self-loop message
                   jax.ShapeDtypeStruct((1, Np), f32),       # s_src (lane-dense row)
                   jax.ShapeDtypeStruct((Np, 1), f32)),      # s_dst (+bias)
        grid=(Np // TN,),
        in_specs=[pl.BlockSpec((TN, Dp), lambda i: (i, 0)),
                  pl.BlockSpec((Dp, 3 * Dp), lambda i: (0, 0)),
                  pl.BlockSpec((8, Dp), lambda i: (0, 0)),
                  pl.BlockSpec((8, Dp), lambda i: (0, 0)),
                  pl.BlockSpec((1, 1), lambda i: (0, 0)),
                  pl.BlockSpec((TN, 1), lambda i: (i, 0))],
        out_specs=(pl.BlockSpec((TN, Dp), lambda i: (i, 0)),
                   pl.BlockSpec((TN, Dp), lambda i: (i, 0)),
                   pl.BlockSpec((1, TN), lambda i: (0, i)),
                   pl.BlockSpec((TN, 1), lambda i: (i, 0))),
        compiler_params=pltpu.CompilerParams(
            dimension_semantics=("parallel",),
            vmem_limit_bytes=vmem_limit),
        cost_estimate=node_cost,
    )(hp, wcat, a_src_p, a_dst_p, a_bias_f, indeg_p)

    # ---- tiled path, kernel 2: attention-weighted aggregation over (dst, src) tiles ----
    n_src_tiles = Np // TS
    agg_cost = pl.CostEstimate(
        flops=int(2 * Np * Np * Dp + 10 * Np * Np),
        transcendentals=int(Np * Np + Np * Dp),
        bytes_accessed=int(Np * Np                              # int8 adjacency, once
                           + n_src_tiles * Np * Dp * 2          # msg re-streamed per dst tile
                           + 2 * Np * Dp + 4 * Np * Dp          # loop (bf16) + out (f32)
                           + n_src_tiles * 4 * Np + 8 * Np))
    out_pad = pl.pallas_call(
        lgcn_agg_kernel,
        out_shape=jax.ShapeDtypeStruct((Np, Dp), f32),
        grid=(Np // TN, n_src_tiles),
        in_specs=[pl.BlockSpec((TN, TS), lambda i, j: (i, j)),     # adjacency tile (int8)
                  pl.BlockSpec((TN, 1), lambda i, j: (i, 0)),      # s_dst
                  pl.BlockSpec((1, TS), lambda i, j: (0, j)),      # s_src row slice
                  pl.BlockSpec((TS, Dp), lambda i, j: (j, 0)),     # msg (bf16)
                  pl.BlockSpec((TN, 1), lambda i, j: (i, 0)),      # norm
                  pl.BlockSpec((TN, Dp), lambda i, j: (i, 0))],    # self-loop msg (bf16)
        out_specs=pl.BlockSpec((TN, Dp), lambda i, j: (i, 0)),
        scratch_shapes=[pltpu.VMEM((TN, Dp), jnp.float32)],
        compiler_params=pltpu.CompilerParams(
            dimension_semantics=("parallel", "arbitrary"),
            vmem_limit_bytes=vmem_limit),
        cost_estimate=agg_cost,
    )(adj_p, s_dst, s_src, msg, norm_p, loop)

    return out_pad[:N, :D]


def lgcn_reference(h, adj, norm, indeg_mask, w_rel, w_loop, w_evo, a_src, a_dst, a_bias):
    msg = h @ w_rel
    s_src = jnp.sum(h * a_src, axis=-1)
    s_dst = jnp.sum(h * a_dst, axis=-1)
    logits = s_dst[:, None] + s_src[None, :] + a_bias[0, 0]
    atten = jax.nn.sigmoid(jnp.maximum(logits, 0.0)) * adj
    feat = (atten @ msg) * norm
    loop = jnp.where(indeg_mask > 0, h @ w_loop, h @ w_evo)
    return jnp.tanh(feat + loop)


def xavier_uniform(key, shape, gain):
    fan_in, fan_out = shape
    bound = gain * np.sqrt(6.0 / (fan_in + fan_out))
    return jax.random.uniform(key, shape, jnp.float32, -bound, bound)


def make_inputs(key, N, D, zero_indeg_nodes=0, density=0.08):
    k_adj, k_h, k_wr, k_wl, k_we, k_aw, k_ab = jax.random.split(key, 7)
    # Deterministic graph: ring (in-degree >= 1 everywhere) + random edges, no self-edges.
    adj_np = np.zeros((N, N), np.float32)                       # adj[dst, src]
    idx = np.arange(N)
    adj_np[(idx + 1) % N, idx] = 1.0
    rand_edges = (jax.random.uniform(k_adj, (N, N)) < density).astype(jnp.float32)
    adj = jnp.maximum(jnp.asarray(adj_np), rand_edges)
    adj = adj * (1.0 - jnp.eye(N, dtype=jnp.float32))
    if zero_indeg_nodes:
        adj = adj.at[:zero_indeg_nodes, :].set(0.0)             # exercise evolve_loop_weight path

    indeg = jnp.sum(adj, axis=1, keepdims=True)                 # [N, 1]
    indeg_mask = (indeg > 0).astype(jnp.float32)
    norm = 1.0 / jnp.maximum(indeg, 1.0)                        # 1/in_degree norm

    h = jax.random.normal(k_h, (N, D), jnp.float32)

    gain = np.sqrt(2.0)                                         # nn.init.calculate_gain('relu')
    w_rel = xavier_uniform(k_wr, (D, D), gain)                  # weight_relation (shared)
    w_loop = xavier_uniform(k_wl, (D, D), gain)                 # loop_weight
    w_evo = xavier_uniform(k_we, (D, D), gain)                  # evolve_loop_weight

    # LineAtt = nn.Linear(2D, 1): weight [1, 2D], bias [1]
    lin_bound = 1.0 / np.sqrt(2 * D)
    a_weight = jax.random.uniform(k_aw, (1, 2 * D), jnp.float32, -lin_bound, lin_bound)
    a_src = a_weight[:, :D]                                     # acts on src feat
    a_dst = a_weight[:, D:]                                     # acts on dst feat
    a_bias = jax.random.uniform(k_ab, (1, 1), jnp.float32, -lin_bound, lin_bound)

    return (h, adj, norm, indeg_mask, w_rel, w_loop, w_evo, a_src, a_dst, a_bias)


if __name__ == "__main__":
    key = jax.random.PRNGKey(0)
    k1, k2 = jax.random.split(key)

    # Test 1: module-sized demo (64 nodes, out_dim=32) -> fused single-kernel path.
    args1 = make_inputs(k1, 64, 32, density=0.1)
    out1 = jax.block_until_ready(lgcn_forward(*args1))
    ref1 = lgcn_reference(*args1)
    np.testing.assert_allclose(np.asarray(out1), np.asarray(ref1), atol=5e-2, rtol=0)

    # Test 2: larger graph forced onto the tiled two-kernel path (TN=TS=512, 2x2 grid),
    # including a few zero-in-degree nodes to exercise the evolve_loop_weight branch.
    args2 = make_inputs(k2, 520, 96, zero_indeg_nodes=4, density=0.05)
    out2 = jax.block_until_ready(lgcn_forward(*args2, force_tiled=True))
    ref2 = lgcn_reference(*args2)
    np.testing.assert_allclose(np.asarray(out2), np.asarray(ref2), atol=5e-2, rtol=0)

    print("KERNEL_OK")
</pallas_src>

<mosaic_0001>
module attributes {stable_mosaic.version = 11 : i64} {
  func.func @lgcn_fused_kernel(%arg0: i32, %arg1: memref<128x128xf32, #tpu.memory_space<vmem>>, %arg2: memref<128x384xbf16, #tpu.memory_space<vmem>>, %arg3: memref<8x128xf32, #tpu.memory_space<vmem>>, %arg4: memref<8x128xf32, #tpu.memory_space<vmem>>, %arg5: memref<1x1xf32, #tpu.memory_space<vmem>>, %arg6: memref<128x1xf32, #tpu.memory_space<vmem>>, %arg7: memref<128x1xf32, #tpu.memory_space<vmem>>, %arg8: memref<128x128xi8, #tpu.memory_space<vmem>>, %arg9: memref<128x128xf32, #tpu.memory_space<vmem>>) attributes {dimension_semantics = [#tpu.dimension_semantics<arbitrary>], iteration_bounds = array<i64: 1>, scalar_prefetch = 0 : i64, scratch_operands = 0 : i64, tpu.core_type = #tpu.core_type<tc>, window_params = [{pipeline_mode = #tpu.pipeline_mode<synchronous>, transform_indices = @transform_0, window_bounds = array<i64: 128, 128>}, {pipeline_mode = #tpu.pipeline_mode<synchronous>, transform_indices = @transform_1, window_bounds = array<i64: 128, 384>}, {pipeline_mode = #tpu.pipeline_mode<synchronous>, transform_indices = @transform_2, window_bounds = array<i64: 8, 128>}, {pipeline_mode = #tpu.pipeline_mode<synchronous>, transform_indices = @transform_3, window_bounds = array<i64: 8, 128>}, {pipeline_mode = #tpu.pipeline_mode<synchronous>, transform_indices = @transform_4, window_bounds = array<i64: 1, 1>}, {pipeline_mode = #tpu.pipeline_mode<synchronous>, transform_indices = @transform_5, window_bounds = array<i64: 128, 1>}, {pipeline_mode = #tpu.pipeline_mode<synchronous>, transform_indices = @transform_6, window_bounds = array<i64: 128, 1>}, {pipeline_mode = #tpu.pipeline_mode<synchronous>, transform_indices = @transform_7, window_bounds = array<i64: 128, 128>}, {pipeline_mode = #tpu.pipeline_mode<synchronous>, transform_indices = @transform_8, window_bounds = array<i64: 128, 128>}]} {
    %c0 = arith.constant 0 : index
    %c0_0 = arith.constant 0 : index
    %0 = vector.load %arg1[%c0, %c0_0] : memref<128x128xf32, #tpu.memory_space<vmem>>, vector<128x128xf32>
    %1 = arith.truncf %0 : vector<128x128xf32> to vector<128x128xbf16>
    %c0_1 = arith.constant 0 : index
    %c0_2 = arith.constant 0 : index
    %2 = vector.load %arg2[%c0_1, %c0_2] : memref<128x384xbf16, #tpu.memory_space<vmem>>, vector<128x384xbf16>
    %cst = arith.constant dense<0.000000e+00> : vector<128x384xf32>
    %3 = tpu.matmul %1, %2, %cst {dimension_numbers = #tpu.dot_dimension_numbers<[1], [0], [0], [1], [0, 0, 1, 1], [], []>} : vector<128x128xbf16>, vector<128x384xbf16>, vector<128x384xf32> -> vector<128x384xf32>
    %4 = vector.extract_strided_slice %3 {offsets = [0, 0], sizes = [128, 128], strides = [1, 1]} : vector<128x384xf32> to vector<128x128xf32>
    %5 = arith.truncf %4 : vector<128x128xf32> to vector<128x128xbf16>
    %c0_3 = arith.constant 0 : index
    %c0_4 = arith.constant 0 : index
    %6 = vector.load %arg6[%c0_3, %c0_4] : memref<128x1xf32, #tpu.memory_space<vmem>>, vector<128x1xf32>
    %cst_5 = arith.constant 0.000000e+00 : f32
    %7 = vector.broadcast %cst_5 : f32 to vector<128x1xf32>
    %8 = arith.cmpf ogt, %6, %7 : vector<128x1xf32>
    %9 = vector.extract_strided_slice %3 {offsets = [0, 128], sizes = [128, 128], strides = [1, 1]} : vector<128x384xf32> to vector<128x128xf32>
    %10 = vector.extract_strided_slice %3 {offsets = [0, 256], sizes = [128, 128], strides = [1, 1]} : vector<128x384xf32> to vector<128x128xf32>
    %11 = vector.shape_cast %8 : vector<128x1xi1> to vector<128x1xi1>
    %12 = vector.broadcast %11 : vector<128x1xi1> to vector<128x128xi1>
    %13 = arith.select %12, %9, %10 : vector<128x128xi1>, vector<128x128xf32>
    %c0_6 = arith.constant 0 : index
    %c0_7 = arith.constant 0 : index
    %14 = vector.load %arg3[%c0_6, %c0_7] : memref<8x128xf32, #tpu.memory_space<vmem>>, vector<8x128xf32>
    %cst_8 = arith.constant dense<0.000000e+00> : vector<8x128xf32>
    %15 = tpu.matmul %14, %0, %cst_8 {dimension_numbers = #tpu.dot_dimension_numbers<[1], [1], [0], [0], [0, 0, 1, 0], [], []>} : vector<8x128xf32>, vector<128x128xf32>, vector<8x128xf32> -> vector<8x128xf32>
    %16 = vector.extract_strided_slice %15 {offsets = [0, 0], sizes = [1, 128], strides = [1, 1]} : vector<8x128xf32> to vector<1x128xf32>
    %c0_9 = arith.constant 0 : index
    %c0_10 = arith.constant 0 : index
    %17 = vector.load %arg4[%c0_9, %c0_10] : memref<8x128xf32, #tpu.memory_space<vmem>>, vector<1x128xf32>
    %18 = vector.broadcast %17 : vector<1x128xf32> to vector<128x128xf32>
    %19 = arith.mulf %0, %18 : vector<128x128xf32>
    %cst_11 = arith.constant dense<0.000000e+00> : vector<128xf32>
    %20 = vector.multi_reduction <add>, %19, %cst_11 [1] : vector<128x128xf32> to vector<128xf32>
    %21 = vector.shape_cast %20 : vector<128xf32> to vector<128x1xf32>
    %c0_12 = arith.constant 0 : index
    %c0_13 = arith.constant 0 : index
    %22 = vector.load %arg5[%c0_12, %c0_13] : memref<1x1xf32, #tpu.memory_space<vmem>>, vector<1x1xf32>
    %23 = vector.broadcast %22 : vector<1x1xf32> to vector<128x1xf32>
    %24 = arith.addf %21, %23 : vector<128x1xf32>
    %25 = vector.broadcast %24 : vector<128x1xf32> to vector<128x128xf32>
    %26 = vector.broadcast %16 : vector<1x128xf32> to vector<128x128xf32>
    %27 = arith.addf %25, %26 : vector<128x128xf32>
    %cst_14 = arith.constant 0.000000e+00 : f32
    %28 = vector.broadcast %cst_14 : f32 to vector<128x128xf32>
    %29 = arith.maximumf %27, %28 : vector<128x128xf32>
    %cst_15 = arith.constant 5.000000e-01 : f32
    %30 = vector.broadcast %cst_15 : f32 to vector<128x128xf32>
    %31 = arith.mulf %30, %29 : vector<128x128xf32>
    %32 = math.tanh %31 : vector<128x128xf32>
    %cst_16 = arith.constant 5.000000e-01 : f32
    %33 = vector.broadcast %cst_16 : f32 to vector<128x128xf32>
    %34 = arith.mulf %33, %32 : vector<128x128xf32>
    %cst_17 = arith.constant 5.000000e-01 : f32
    %35 = vector.broadcast %cst_17 : f32 to vector<128x128xf32>
    %36 = arith.addf %35, %34 : vector<128x128xf32>
    %c0_18 = arith.constant 0 : index
    %c0_19 = arith.constant 0 : index
    %37 = vector.load %arg8[%c0_18, %c0_19] : memref<128x128xi8, #tpu.memory_space<vmem>>, vector<128x128xi8>
    %c0_i8 = arith.constant 0 : i8
    %38 = vector.broadcast %c0_i8 : i8 to vector<128x128xi8>
    %39 = arith.cmpi ne, %37, %38 : vector<128x128xi8>
    %cst_20 = arith.constant 0.000000e+00 : f32
    %40 = vector.broadcast %cst_20 : f32 to vector<128x128xf32>
    %41 = arith.select %39, %36, %40 : vector<128x128xi1>, vector<128x128xf32>
    %42 = arith.truncf %41 : vector<128x128xf32> to vector<128x128xbf16>
    %cst_21 = arith.constant dense<0.000000e+00> : vector<128x128xf32>
    %43 = tpu.matmul %42, %5, %cst_21 {dimension_numbers = #tpu.dot_dimension_numbers<[1], [0], [0], [1], [0, 0, 1, 1], [], []>} : vector<128x128xbf16>, vector<128x128xbf16>, vector<128x128xf32> -> vector<128x128xf32>
    %c0_22 = arith.constant 0 : index
    %c0_23 = arith.constant 0 : index
    %44 = vector.load %arg7[%c0_22, %c0_23] : memref<128x1xf32, #tpu.memory_space<vmem>>, vector<128x1xf32>
    %45 = vector.broadcast %44 : vector<128x1xf32> to vector<128x128xf32>
    %46 = arith.mulf %43, %45 : vector<128x128xf32>
    %47 = arith.addf %46, %13 : vector<128x128xf32>
    %48 = math.tanh %47 : vector<128x128xf32>
    %c0_24 = arith.constant 0 : index
    %c0_25 = arith.constant 0 : index
    %49 = vector.load %arg9[%c0_24, %c0_25] : memref<128x128xf32, #tpu.memory_space<vmem>>, vector<128x128xf32>
    tpu.vector_store %arg9[%c0_24, %c0_25], %48 {strides = array<i32>} : memref<128x128xf32, #tpu.memory_space<vmem>>, vector<128x128xf32>,
    return
  }
  func.func @transform_0(%arg0: i32) -> (i32, i32) {
    %c0_i32 = arith.constant 0 : i32
    %c0_i32_0 = arith.constant 0 : i32
    %c0_i32_1 = arith.constant 0 : i32
    return %c0_i32, %c0_i32_0 : i32, i32
  }
  func.func @transform_1(%arg0: i32) -> (i32, i32) {
    %c0_i32 = arith.constant 0 : i32
    %c0_i32_0 = arith.constant 0 : i32
    %c0_i32_1 = arith.constant 0 : i32
    return %c0_i32, %c0_i32_0 : i32, i32
  }
  func.func @transform_2(%arg0: i32) -> (i32, i32) {
    %c0_i32 = arith.constant 0 : i32
    %c0_i32_0 = arith.constant 0 : i32
    %c0_i32_1 = arith.constant 0 : i32
    return %c0_i32, %c0_i32_0 : i32, i32
  }
  func.func @transform_3(%arg0: i32) -> (i32, i32) {
    %c0_i32 = arith.constant 0 : i32
    %c0_i32_0 = arith.constant 0 : i32
    %c0_i32_1 = arith.constant 0 : i32
    return %c0_i32, %c0_i32_0 : i32, i32
  }
  func.func @transform_4(%arg0: i32) -> (i32, i32) {
    %c0_i32 = arith.constant 0 : i32
    %c0_i32_0 = arith.constant 0 : i32
    %c0_i32_1 = arith.constant 0 : i32
    return %c0_i32, %c0_i32_0 : i32, i32
  }
  func.func @transform_5(%arg0: i32) -> (i32, i32) {
    %c0_i32 = arith.constant 0 : i32
    %c0_i32_0 = arith.constant 0 : i32
    %c0_i32_1 = arith.constant 0 : i32
    return %c0_i32, %c0_i32_0 : i32, i32
  }
  func.func @transform_6(%arg0: i32) -> (i32, i32) {
    %c0_i32 = arith.constant 0 : i32
    %c0_i32_0 = arith.constant 0 : i32
    %c0_i32_1 = arith.constant 0 : i32
    return %c0_i32, %c0_i32_0 : i32, i32
  }
  func.func @transform_7(%arg0: i32) -> (i32, i32) {
    %c0_i32 = arith.constant 0 : i32
    %c0_i32_0 = arith.constant 0 : i32
    %c0_i32_1 = arith.constant 0 : i32
    return %c0_i32, %c0_i32_0 : i32, i32
  }
  func.func @transform_8(%arg0: i32) -> (i32, i32) {
    %c0_i32 = arith.constant 0 : i32
    %c0_i32_0 = arith.constant 0 : i32
    %c0_i32_1 = arith.constant 0 : i32
    return %c0_i32, %c0_i32_0 : i32, i32
  }
}

</mosaic_0001>

<llo_original>
// kernel: tpu_custom_call.1
$region0: #{tpu_custom_call.1}
  #allocation0 [shape = 'u32[]', space=smem, size = 0x4, offset = 0x4, fixed_abs, tag = 'smem constant byte address 0x4 - core index']
  #allocation1 [shape = 'u32[144,128]{1,0:T(1,128)}', space=vmem, size = 0x12000, scoped, tag = 'internal scratch']
  #allocation2 [shape = 'f32[1,1]{1,0:T(1,128)S(1)}', space=vmem, size = 0x200, scoped, tag = 'scoped memory for tpu_custom_call.1']
  %s0 = inlined_call_operand.hbm [shape: f32[128,128], index: 0, kind: input, shape index: {}]
  %s1 = inlined_call_operand.vmem [shape: bf16[128,384], index: 1, kind: input, shape index: {}]
  %s2 = inlined_call_operand.vmem [shape: f32[8,128], index: 2, kind: input, shape index: {}]
  %s3 = inlined_call_operand.vmem [shape: f32[8,128], index: 3, kind: input, shape index: {}]
  %s4 = inlined_call_operand.<no memory space> [shape: f32[1,1], index: 4, kind: input, shape index: {}]
  %s5 = inlined_call_operand.vmem [shape: f32[128,1], index: 5, kind: input, shape index: {}]
  %s6 = inlined_call_operand.vmem [shape: f32[128,1], index: 6, kind: input, shape index: {}]
  %s7 = inlined_call_operand.vmem [shape: s8[128,128], index: 7, kind: input, shape index: {}]
  %s8 = inlined_call_operand.hbm [shape: f32[128,128], index: 8, kind: output, shape index: {}]
  %s9 = sld [smem:[#allocation0]]
  $region46: #{tpu_custom_call.1} parent=0
    _
  %s11 = ssub.s32 1, %s9
  %s12 = scalar_select 0, %s11, %s9
  %v13 = vstv %s4
  %14 = vst [vmem:[#allocation2] sm:$0x1] %v13
  $region1: #{tpu_custom_call.1} parent=0
    #allocation3 [shape = 'u8[65536]{0}', space=vmem, size = 0x10000, scoped, tag = 'input window, operand 0, single buffered']
    #allocation4 [shape = 's32[1]{0}', space=sflag, size = 0x4, scoped, tag = 'scoped memory for tpu_custom_call.1']
    #allocation5 [shape = 's32[1]{0}', space=sflag, size = 0x4, scoped, tag = 'scoped memory for tpu_custom_call.1']
    #allocation6 [shape = 'u8[65536]{0}', space=vmem, size = 0x10000, scoped, tag = 'output window, operand 0, single buffered']
    %15 = vsyncpa [#allocation4], 0
    %16 = vsyncpa [#allocation5], 0
    // Predicated region
    $region2: #{tpu_custom_call.1} parent=1 // pred_check
      _
    $region3: #{tpu_custom_call.1} parent=1 // pred_check_branch
      %18 = sbr.rel (0) target = $region5
    $region4: #{tpu_custom_call.1} parent=1 // pred_region
      %s20 = ssub.s32 2048, 2048
      %21 = vsyncadd [#allocation4], %s20
      %s22 = sshll.u32 [#allocation3], 4
      %s23 = int_to_ptr.vmem [resolvable:$true] %s22
      %28 = dma.hbm_to_vmem [thread:$0]  %s0, 2048, %s23, [#allocation4], 128, 128, 8
    $region5: #{tpu_custom_call.1} parent=1 // pred_fallthru
      _
    // Predicated region
    $region6: #{tpu_custom_call.1} parent=1 // pred_check
      _
    $region7: #{tpu_custom_call.1} parent=1 // pred_check_branch
      %30 = sbr.rel (0) target = $region9
    $region8: #{tpu_custom_call.1} parent=1 // pred_region
      _
    $region9: #{tpu_custom_call.1} parent=1 // pred_fallthru
      _
    // Predicated region
    $region10: #{tpu_custom_call.1} parent=1 // pred_check
      _
    $region11: #{tpu_custom_call.1} parent=1 // pred_check_branch
      %32 = sbr.rel (0) target = $region13
    $region12: #{tpu_custom_call.1} parent=1 // pred_region
      _
    $region13: #{tpu_custom_call.1} parent=1 // pred_fallthru
      _
    // Predicated region
    $region14: #{tpu_custom_call.1} parent=1 // pred_check
      _
    $region15: #{tpu_custom_call.1} parent=1 // pred_check_branch
      %34 = sbr.rel (0) target = $region17
    $region16: #{tpu_custom_call.1} parent=1 // pred_region
      _
    $region17: #{tpu_custom_call.1} parent=1 // pred_fallthru
      _
    // Predicated region
    $region18: #{tpu_custom_call.1} parent=1 // pred_check
      _
    $region19: #{tpu_custom_call.1} parent=1 // pred_check_branch
      %36 = sbr.rel (0) target = $region21
    $region20: #{tpu_custom_call.1} parent=1 // pred_region
      _
    $region21: #{tpu_custom_call.1} parent=1 // pred_fallthru
      _
    // Predicated region
    $region22: #{tpu_custom_call.1} parent=1 // pred_check
      _
    $region23: #{tpu_custom_call.1} parent=1 // pred_check_branch
      %38 = sbr.rel (0) target = $region25
    $region24: #{tpu_custom_call.1} parent=1 // pred_region
      _
    $region25: #{tpu_custom_call.1} parent=1 // pred_fallthru
      _
    // Predicated region
    $region26: #{tpu_custom_call.1} parent=1 // pred_check
      _
    $region27: #{tpu_custom_call.1} parent=1 // pred_check_branch
      %40 = sbr.rel (0) target = $region29
    $region28: #{tpu_custom_call.1} parent=1 // pred_region
      _
    $region29: #{tpu_custom_call.1} parent=1 // pred_fallthru
      _
    // Predicated region
    $region30: #{tpu_custom_call.1} parent=1 // pred_check
      _
    $region31: #{tpu_custom_call.1} parent=1 // pred_check_branch
      %42 = sbr.rel (0) target = $region33
    $region32: #{tpu_custom_call.1} parent=1 // pred_region
      _
    $region33: #{tpu_custom_call.1} parent=1 // pred_fallthru
      _
    // Predicated region
    $region34: #{tpu_custom_call.1} parent=1 // pred_check
      _
    $region35: #{tpu_custom_call.1} parent=1 // pred_check_branch
      %44 = sbr.rel (0) target = $region37
    $region36: #{tpu_custom_call.1} parent=1 // pred_region
      %45 = dma.done [#allocation4], 2048
    $region37: #{tpu_custom_call.1} parent=1 // pred_fallthru
      _
    %v49 = vld [vmem:[#allocation3] sm:$0xff]
    %v50 = vld [vmem:[#allocation3 + $0x8] sm:$0xff]
    %v51 = vld [vmem:[#allocation3 + $0x10] sm:$0xff]
    %v52 = vld [vmem:[#allocation3 + $0x18] sm:$0xff]
    %v53 = vld [vmem:[#allocation3 + $0x20] sm:$0xff]
    %v54 = vld [vmem:[#allocation3 + $0x28] sm:$0xff]
    %v55 = vld [vmem:[#allocation3 + $0x30] sm:$0xff]
    %v56 = vld [vmem:[#allocation3 + $0x38] sm:$0xff]
    %v57 = vld [vmem:[#allocation3 + $0x40] sm:$0xff]
    %v58 = vld [vmem:[#allocation3 + $0x48] sm:$0xff]
    %v59 = vld [vmem:[#allocation3 + $0x50] sm:$0xff]
    %v60 = vld [vmem:[#allocation3 + $0x58] sm:$0xff]
    %v61 = vld [vmem:[#allocation3 + $0x60] sm:$0xff]
    %v62 = vld [vmem:[#allocation3 + $0x68] sm:$0xff]
    %v63 = vld [vmem:[#allocation3 + $0x70] sm:$0xff]
    %v64 = vld [vmem:[#allocation3 + $0x78] sm:$0xff]
    %v65 = vpack.c.bf16 %v50, %v49
    %v66 = vpack.c.bf16 %v52, %v51
    %v67 = vpack.c.bf16 %v54, %v53
    %v68 = vpack.c.bf16 %v56, %v55
    %v69 = vpack.c.bf16 %v58, %v57
    %v70 = vpack.c.bf16 %v60, %v59
    %v71 = vpack.c.bf16 %v62, %v61
    %v72 = vpack.c.bf16 %v64, %v63
    %v73 = vld [vmem:[%s1] sm:$0xff]
    %v74 = vld [vmem:[%s1 + $0x8] sm:$0xf]
    %v75 = vld [vmem:[%s1 + $0xc] sm:$0xff]
    %v76 = vld [vmem:[%s1 + $0x14] sm:$0xf]
    %v77 = vld [vmem:[%s1 + $0x18] sm:$0xff]
    %v78 = vld [vmem:[%s1 + $0x20] sm:$0xf]
    %v79 = vld [vmem:[%s1 + $0x24] sm:$0xff]
    %v80 = vld [vmem:[%s1 + $0x2c] sm:$0xf]
    %v81 = vld [vmem:[%s1 + $0x30] sm:$0xff]
    %v82 = vld [vmem:[%s1 + $0x38] sm:$0xf]
    %v83 = vld [vmem:[%s1 + $0x3c] sm:$0xff]
    %v84 = vld [vmem:[%s1 + $0x44] sm:$0xf]
    %v85 = vld [vmem:[%s1 + $0x48] sm:$0xff]
    %v86 = vld [vmem:[%s1 + $0x50] sm:$0xf]
    %v87 = vld [vmem:[%s1 + $0x54] sm:$0xff]
    %v88 = vld [vmem:[%s1 + $0x5c] sm:$0xf]
    %v89 = vld [vmem:[%s1 + $0x60] sm:$0xff]
    %v90 = vld [vmem:[%s1 + $0x68] sm:$0xf]
    %v91 = vld [vmem:[%s1 + $0x6c] sm:$0xff]
    %v92 = vld [vmem:[%s1 + $0x74] sm:$0xf]
    %v93 = vld [vmem:[%s1 + $0x78] sm:$0xff]
    %v94 = vld [vmem:[%s1 + $0x80] sm:$0xf]
    %v95 = vld [vmem:[%s1 + $0x84] sm:$0xff]
    %v96 = vld [vmem:[%s1 + $0x8c] sm:$0xf]
    %v97 = vld [vmem:[%s1 + $0x90] sm:$0xff]
    %v98 = vld [vmem:[%s1 + $0x98] sm:$0xf]
    %v99 = vld [vmem:[%s1 + $0x9c] sm:$0xff]
    %v100 = vld [vmem:[%s1 + $0xa4] sm:$0xf]
    %v101 = vld [vmem:[%s1 + $0xa8] sm:$0xff]
    %v102 = vld [vmem:[%s1 + $0xb0] sm:$0xf]
    %v103 = vld [vmem:[%s1 + $0xb4] sm:$0xff]
    %v104 = vld [vmem:[%s1 + $0xbc] sm:$0xf]
    %v137 = vunpack.c.l.b16 %v73
    %v138 = vunpack.c.h.b16 %v73
    %v139 = vunpack.c.l.b16 %v74
    %v140 = vunpack.c.l.b16 %v75
    %v141 = vunpack.c.h.b16 %v75
    %v142 = vunpack.c.l.b16 %v76
    %v143 = vunpack.c.l.b16 %v77
    %v144 = vunpack.c.h.b16 %v77
    %v145 = vunpack.c.l.b16 %v78
    %v146 = vunpack.c.l.b16 %v79
    %v147 = vunpack.c.h.b16 %v79
    %v148 = vunpack.c.l.b16 %v80
    %v149 = vunpack.c.l.b16 %v81
    %v150 = vunpack.c.h.b16 %v81
    %v151 = vunpack.c.l.b16 %v82
    %v152 = vunpack.c.l.b16 %v83
    %v153 = vunpack.c.h.b16 %v83
    %v154 = vunpack.c.l.b16 %v84
    %v155 = vunpack.c.l.b16 %v85
    %v156 = vunpack.c.h.b16 %v85
    %v157 = vunpack.c.l.b16 %v86
    %v158 = vunpack.c.l.b16 %v87
    %v159 = vunpack.c.h.b16 %v87
    %v160 = vunpack.c.l.b16 %v88
    %v161 = vunpack.c.l.b16 %v89
    %v162 = vunpack.c.h.b16 %v89
    %v163 = vunpack.c.l.b16 %v90
    %v164 = vunpack.c.l.b16 %v91
    %v165 = vunpack.c.h.b16 %v91
    %v166 = vunpack.c.l.b16 %v92
    %v167 = vunpack.c.l.b16 %v93
    %v168 = vunpack.c.h.b16 %v93
    %v169 = vunpack.c.l.b16 %v94
    %v170 = vunpack.c.l.b16 %v95
    %v171 = vunpack.c.h.b16 %v95
    %v172 = vunpack.c.l.b16 %v96
    %v173 = vunpack.c.l.b16 %v97
    %v174 = vunpack.c.h.b16 %v97
    %v175 = vunpack.c.l.b16 %v98
    %v176 = vunpack.c.l.b16 %v99
    %v177 = vunpack.c.h.b16 %v99
    %v178 = vunpack.c.l.b16 %v100
    %v179 = vunpack.c.l.b16 %v101
    %v180 = vunpack.c.h.b16 %v101
    %v181 = vunpack.c.l.b16 %v102
    %v182 = vunpack.c.l.b16 %v103
    %v183 = vunpack.c.h.b16 %v103
    %v184 = vunpack.c.l.b16 %v104
    %v185 = vpack.c.b16 %v140, %v137
    %v186 = vpack.c.b16 %v141, %v138
    %v187 = vpack.c.b16 %v142, %v139
    %v188 = vpack.c.b16 %v146, %v143
    %v189 = vpack.c.b16 %v147, %v144
    %v190 = vpack.c.b16 %v148, %v145
    %v191 = vpack.c.b16 %v152, %v149
    %v192 = vpack.c.b16 %v153, %v150
    %v193 = vpack.c.b16 %v154, %v151
    %v194 = vpack.c.b16 %v158, %v155
    %v195 = vpack.c.b16 %v159, %v156
    %v196 = vpack.c.b16 %v160, %v157
    %v197 = vpack.c.b16 %v164, %v161
    %v198 = vpack.c.b16 %v165, %v162
    %v199 = vpack.c.b16 %v166, %v163
    %v200 = vpack.c.b16 %v170, %v167
    %v201 = vpack.c.b16 %v171, %v168
    %v202 = vpack.c.b16 %v172, %v169
    %v203 = vpack.c.b16 %v176, %v173
    %v204 = vpack.c.b16 %v177, %v174
    %v205 = vpack.c.b16 %v178, %v175
    %v206 = vpack.c.b16 %v182, %v179
    %v207 = vpack.c.b16 %v183, %v180
    %v208 = vpack.c.b16 %v184, %v181
    %233 = vmatprep.subr.bf16.mxu0 %v207
    %234 = vmatpush1.bf16.msra.mxu0 %v206
    %235 = vmatprep.subr.bf16.mxu0 %v204
    %236 = vmatpush1.bf16.msra.mxu0 %v203
    %237 = vmatprep.subr.bf16.mxu0 %v201
    %238 = vmatpush1.bf16.msra.mxu0 %v200
    %239 = vmatprep.subr.bf16.mxu0 %v198
    %240 = vmatpush1.bf16.msra.mxu0 %v197
    %241 = vmatprep.subr.bf16.mxu0 %v195
    %242 = vmatpush1.bf16.msra.mxu0 %v194
    %243 = vmatprep.subr.bf16.mxu0 %v192
    %244 = vmatpush1.bf16.msra.mxu0 %v191
    %245 = vmatprep.subr.bf16.mxu0 %v189
    %246 = vmatpush1.bf16.msra.mxu0 %v188
    %247 = vmatprep.subr.bf16.mxu0 %v186
    %248 = vmatpush1.bf16.msra.mxu0 %v185
    %249 = vmatprep.subr.bf16.mxu0 0
    %250 = vmatpush2.bf16.msra.mxu0 0
    %251 = vmatprep.subr.bf16.mxu0 0
    %252 = vmatpush2.bf16.msra.mxu0 0
    %253 = vmatprep.subr.bf16.mxu0 0
    %254 = vmatpush2.bf16.msra.mxu0 0
    %255 = vmatprep.subr.bf16.mxu0 0
    %256 = vmatpush2.bf16.msra.mxu0 0
    %257 = vmatprep.subr.bf16.mxu0 0
    %258 = vmatpush2.bf16.msra.mxu0 0
    %259 = vmatprep.subr.bf16.mxu0 0
    %260 = vmatpush2.bf16.msra.mxu0 0
    %261 = vmatprep.subr.bf16.mxu0 0
    %262 = vmatpush2.bf16.msra.mxu0 0
    %263 = vmatprep.subr.bf16.mxu0 0
    %264 = vmatpush2.bf16.msra.mxu0 0
    %265 = vmatprep.mubr.bf16.mxu0 0
    %266 = vmatmul.mubr.bf16.gmra.mxu0 %v65
    %v267 = vpop.f32.mrf.mxu0
    %v268 = vadd.f32 0.0, %v267
    %v269 = vpop.f32.mrf.mxu0
    %v270 = vadd.f32 0.0, %v269
    %v271 = vpop.f32.mrf.mxu0
    %v272 = vadd.f32 0.0, %v271
    %v273 = vpop.f32.mrf.mxu0
    %v274 = vadd.f32 0.0, %v273
    %275 = vmatprep.mubr.bf16.mxu0 0
    %276 = vmatmul.mubr.bf16.gmra.mxu0 %v66
    %v277 = vpop.f32.mrf.mxu0
    %v278 = vadd.f32 0.0, %v277
    %v279 = vpop.f32.mrf.mxu0
    %v280 = vadd.f32 0.0, %v279
    %v281 = vpop.f32.mrf.mxu0
    %v282 = vadd.f32 0.0, %v281
    %v283 = vpop.f32.mrf.mxu0
    %v284 = vadd.f32 0.0, %v283
    %285 = vmatprep.mubr.bf16.mxu0 0
    %286 = vmatmul.mubr.bf16.gmra.mxu0 %v67
    %v287 = vpop.f32.mrf.mxu0
    %v288 = vadd.f32 0.0, %v287
    %v289 = vpop.f32.mrf.mxu0
    %v290 = vadd.f32 0.0, %v289
    %v291 = vpop.f32.mrf.mxu0
    %v292 = vadd.f32 0.0, %v291
    %v293 = vpop.f32.mrf.mxu0
    %v294 = vadd.f32 0.0, %v293
    %295 = vmatprep.mubr.bf16.mxu0 0
    %296 = vmatmul.mubr.bf16.gmra.mxu0 %v68
    %v297 = vpop.f32.mrf.mxu0
    %v298 = vadd.f32 0.0, %v297
    %v299 = vpop.f32.mrf.mxu0
    %v300 = vadd.f32 0.0, %v299
    %v301 = vpop.f32.mrf.mxu0
    %v302 = vadd.f32 0.0, %v301
    %v303 = vpop.f32.mrf.mxu0
    %v304 = vadd.f32 0.0, %v303
    %305 = vmatprep.mubr.bf16.mxu0 0
    %306 = vmatmul.mubr.bf16.gmra.mxu0 %v69
    %v307 = vpop.f32.mrf.mxu0
    %v308 = vadd.f32 0.0, %v307
    %v309 = vpop.f32.mrf.mxu0
    %v310 = vadd.f32 0.0, %v309
    %v311 = vpop.f32.mrf.mxu0
    %v312 = vadd.f32 0.0, %v311
    %v313 = vpop.f32.mrf.mxu0
    %v314 = vadd.f32 0.0, %v313
    %315 = vmatprep.mubr.bf16.mxu0 0
    %316 = vmatmul.mubr.bf16.gmra.mxu0 %v70
    %v317 = vpop.f32.mrf.mxu0
    %v318 = vadd.f32 0.0, %v317
    %v319 = vpop.f32.mrf.mxu0
    %v320 = vadd.f32 0.0, %v319
    %v321 = vpop.f32.mrf.mxu0
    %v322 = vadd.f32 0.0, %v321
    %v323 = vpop.f32.mrf.mxu0
    %v324 = vadd.f32 0.0, %v323
    %325 = vmatprep.mubr.bf16.mxu0 0
    %326 = vmatmul.mubr.bf16.gmra.mxu0 %v71
    %v327 = vpop.f32.mrf.mxu0
    %v328 = vadd.f32 0.0, %v327
    %v329 = vpop.f32.mrf.mxu0
    %v330 = vadd.f32 0.0, %v329
    %v331 = vpop.f32.mrf.mxu0
    %v332 = vadd.f32 0.0, %v331
    %v333 = vpop.f32.mrf.mxu0
    %v334 = vadd.f32 0.0, %v333
    %335 = vmatprep.mubr.bf16.mxu0 0
    %336 = vmatmul.mubr.bf16.gmra.mxu0 %v72
    %v337 = vpop.f32.mrf.mxu0
    %v338 = vadd.f32 0.0, %v337
    %v339 = vpop.f32.mrf.mxu0
    %v340 = vadd.f32 0.0, %v339
    %v341 = vpop.f32.mrf.mxu0
    %v342 = vadd.f32 0.0, %v341
    %v343 = vpop.f32.mrf.mxu0
    %v344 = vadd.f32 0.0, %v343
    %345 = vdwg.mxu0
    %346 = vmatprep.subr.bf16.mxu0 0
    %347 = vmatpush1.bf16.msra.mxu0 %v208
    %348 = vmatprep.subr.bf16.mxu0 0
    %349 = vmatpush1.bf16.msra.mxu0 %v205
    %350 = vmatprep.subr.bf16.mxu0 0
    %351 = vmatpush1.bf16.msra.mxu0 %v202
    %352 = vmatprep.subr.bf16.mxu0 0
    %353 = vmatpush1.bf16.msra.mxu0 %v199
    %354 = vmatprep.subr.bf16.mxu0 0
    %355 = vmatpush1.bf16.msra.mxu0 %v196
    %356 = vmatprep.subr.bf16.mxu0 0
    %357 = vmatpush1.bf16.msra.mxu0 %v193
    %358 = vmatprep.subr.bf16.mxu0 0
    %359 = vmatpush1.bf16.msra.mxu0 %v190
    %360 = vmatprep.subr.bf16.mxu0 0
    %361 = vmatpush1.bf16.msra.mxu0 %v187
    %362 = vmatprep.subr.bf16.mxu0 0
    %363 = vmatpush2.bf16.msra.mxu0 0
    %364 = vmatprep.subr.bf16.mxu0 0
    %365 = vmatpush2.bf16.msra.mxu0 0
    %366 = vmatprep.subr.bf16.mxu0 0
    %367 = vmatpush2.bf16.msra.mxu0 0
    %368 = vmatprep.subr.bf16.mxu0 0
    %369 = vmatpush2.bf16.msra.mxu0 0
    %370 = vmatprep.subr.bf16.mxu0 0
    %371 = vmatpush2.bf16.msra.mxu0 0
    %372 = vmatprep.subr.bf16.mxu0 0
    %373 = vmatpush2.bf16.msra.mxu0 0
    %374 = vmatprep.subr.bf16.mxu0 0
    %375 = vmatpush2.bf16.msra.mxu0 0
    %376 = vmatprep.subr.bf16.mxu0 0
    %377 = vmatpush2.bf16.msra.mxu0 0
    %378 = vmatprep.mubr.bf16.mxu0 0
    %379 = vmatmul.mubr.bf16.gmra.mxu0 %v65
    %v380 = vpop.f32.mrf.mxu0
    %v381 = vadd.f32 0.0, %v380
    %v382 = vpop.f32.mrf.mxu0
    %v383 = vpop.f32.mrf.mxu0
    %v384 = vadd.f32 0.0, %v383
    %v385 = vpop.f32.mrf.mxu0
    %386 = vmatprep.mubr.bf16.mxu0 0
    %387 = vmatmul.mubr.bf16.gmra.mxu0 %v66
    %v388 = vpop.f32.mrf.mxu0
    %v389 = vadd.f32 0.0, %v388
    %v390 = vpop.f32.mrf.mxu0
    %v391 = vpop.f32.mrf.mxu0
    %v392 = vadd.f32 0.0, %v391
    %v393 = vpop.f32.mrf.mxu0
    %394 = vmatprep.mubr.bf16.mxu0 0
    %395 = vmatmul.mubr.bf16.gmra.mxu0 %v67
    %v396 = vpop.f32.mrf.mxu0
    %v397 = vadd.f32 0.0, %v396
    %v398 = vpop.f32.mrf.mxu0
    %v399 = vpop.f32.mrf.mxu0
    %v400 = vadd.f32 0.0, %v399
    %v401 = vpop.f32.mrf.mxu0
    %402 = vmatprep.mubr.bf16.mxu0 0
    %403 = vmatmul.mubr.bf16.gmra.mxu0 %v68
    %v404 = vpop.f32.mrf.mxu0
    %v405 = vadd.f32 0.0, %v404
    %v406 = vpop.f32.mrf.mxu0
    %v407 = vpop.f32.mrf.mxu0
    %v408 = vadd.f32 0.0, %v407
    %v409 = vpop.f32.mrf.mxu0
    %410 = vmatprep.mubr.bf16.mxu0 0
    %411 = vmatmul.mubr.bf16.gmra.mxu0 %v69
    %v412 = vpop.f32.mrf.mxu0
    %v413 = vadd.f32 0.0, %v412
    %v414 = vpop.f32.mrf.mxu0
    %v415 = vpop.f32.mrf.mxu0
    %v416 = vadd.f32 0.0, %v415
    %v417 = vpop.f32.mrf.mxu0
    %418 = vmatprep.mubr.bf16.mxu0 0
    %419 = vmatmul.mubr.bf16.gmra.mxu0 %v70
    %v420 = vpop.f32.mrf.mxu0
    %v421 = vadd.f32 0.0, %v420
    %v422 = vpop.f32.mrf.mxu0
    %v423 = vpop.f32.mrf.mxu0
    %v424 = vadd.f32 0.0, %v423
    %v425 = vpop.f32.mrf.mxu0
    %426 = vmatprep.mubr.bf16.mxu0 0
    %427 = vmatmul.mubr.bf16.gmra.mxu0 %v71
    %v428 = vpop.f32.mrf.mxu0
    %v429 = vadd.f32 0.0, %v428
    %v430 = vpop.f32.mrf.mxu0
    %v431 = vpop.f32.mrf.mxu0
    %v432 = vadd.f32 0.0, %v431
    %v433 = vpop.f32.mrf.mxu0
    %434 = vmatprep.mubr.bf16.mxu0 0
    %435 = vmatmul.mubr.bf16.gmra.mxu0 %v72
    %v436 = vpop.f32.mrf.mxu0
    %v437 = vadd.f32 0.0, %v436
    %v438 = vpop.f32.mrf.mxu0
    %v439 = vpop.f32.mrf.mxu0
    %v440 = vadd.f32 0.0, %v439
    %v441 = vpop.f32.mrf.mxu0
    %442 = vdwg.mxu0
    %v443 = vpack.c.bf16 %v272, %v268
    %v444 = vpack.c.bf16 %v282, %v278
    %v445 = vpack.c.bf16 %v292, %v288
    %v446 = vpack.c.bf16 %v302, %v298
    %v447 = vpack.c.bf16 %v312, %v308
    %v448 = vpack.c.bf16 %v322, %v318
    %v449 = vpack.c.bf16 %v332, %v328
    %v450 = vpack.c.bf16 %v342, %v338
    %v451 = vld [vmem:[%s5] sm:$0xff]
    %v452 = vld [vmem:[%s5 + $0x8] sm:$0xff]
    %v453 = vld [vmem:[%s5 + $0x10] sm:$0xff]
    %v454 = vld [vmem:[%s5 + $0x18] sm:$0xff]
    %v455 = vld [vmem:[%s5 + $0x20] sm:$0xff]
    %v456 = vld [vmem:[%s5 + $0x28] sm:$0xff]
    %v457 = vld [vmem:[%s5 + $0x30] sm:$0xff]
    %v458 = vld [vmem:[%s5 + $0x38] sm:$0xff]
    %v459 = vld [vmem:[%s5 + $0x40] sm:$0xff]
    %v460 = vld [vmem:[%s5 + $0x48] sm:$0xff]
    %v461 = vld [vmem:[%s5 + $0x50] sm:$0xff]
    %v462 = vld [vmem:[%s5 + $0x58] sm:$0xff]
    %v463 = vld [vmem:[%s5 + $0x60] sm:$0xff]
    %v464 = vld [vmem:[%s5 + $0x68] sm:$0xff]
    %v465 = vld [vmem:[%s5 + $0x70] sm:$0xff]
    %v466 = vld [vmem:[%s5 + $0x78] sm:$0xff]
    %vm467 = vcmp.gt.f32.partialorder %v451, 0.0
    %vm468 = vcmp.gt.f32.partialorder %v452, 0.0
    %vm469 = vcmp.gt.f32.partialorder %v453, 0.0
    %vm470 = vcmp.gt.f32.partialorder %v454, 0.0
    %vm471 = vcmp.gt.f32.partialorder %v455, 0.0
    %vm472 = vcmp.gt.f32.partialorder %v456, 0.0
    %vm473 = vcmp.gt.f32.partialorder %v457, 0.0
    %vm474 = vcmp.gt.f32.partialorder %v458, 0.0
    %vm475 = vcmp.gt.f32.partialorder %v459, 0.0
    %vm476 = vcmp.gt.f32.partialorder %v460, 0.0
    %vm477 = vcmp.gt.f32.partialorder %v461, 0.0
    %vm478 = vcmp.gt.f32.partialorder %v462, 0.0
    %vm479 = vcmp.gt.f32.partialorder %v463, 0.0
    %vm480 = vcmp.gt.f32.partialorder %v464, 0.0
    %vm481 = vcmp.gt.f32.partialorder %v465, 0.0
    %vm482 = vcmp.gt.f32.partialorder %v466, 0.0
    %v483 = vsel %vm467, 1, 0
    %v484 = vsel %vm468, 1, 0
    %v485 = vsel %vm469, 1, 0
    %v486 = vsel %vm470, 1, 0
    %v487 = vsel %vm471, 1, 0
    %v488 = vsel %vm472, 1, 0
    %v489 = vsel %vm473, 1, 0
    %v490 = vsel %vm474, 1, 0
    %v491 = vsel %vm475, 1, 0
    %v492 = vsel %vm476, 1, 0
    %v493 = vsel %vm477, 1, 0
    %v494 = vsel %vm478, 1, 0
    %v495 = vsel %vm479, 1, 0
    %v496 = vsel %vm480, 1, 0
    %v497 = vsel %vm481, 1, 0
    %v498 = vsel %vm482, 1, 0
    %499 = vset.pattern.permute.xlu0 0
    %500 = vperm.xlu0 %499, %v483
    %v501 = vpop.permute.xlu0 %500
    %502 = vset.pattern.permute.xlu0 0
    %503 = vperm.xlu0 %502, %v484
    %v504 = vpop.permute.xlu0 %503
    %505 = vset.pattern.permute.xlu0 0
    %506 = vperm.xlu0 %505, %v485
    %v507 = vpop.permute.xlu0 %506
    %508 = vset.pattern.permute.xlu0 0
    %509 = vperm.xlu0 %508, %v486
    %v510 = vpop.permute.xlu0 %509
    %511 = vset.pattern.permute.xlu0 0
    %512 = vperm.xlu0 %511, %v487
    %v513 = vpop.permute.xlu0 %512
    %514 = vset.pattern.permute.xlu0 0
    %515 = vperm.xlu0 %514, %v488
    %v516 = vpop.permute.xlu0 %515
    %517 = vset.pattern.permute.xlu0 0
    %518 = vperm.xlu0 %517, %v489
    %v519 = vpop.permute.xlu0 %518
    %520 = vset.pattern.permute.xlu0 0
    %521 = vperm.xlu0 %520, %v490
    %v522 = vpop.permute.xlu0 %521
    %523 = vset.pattern.permute.xlu0 0
    %524 = vperm.xlu0 %523, %v491
    %v525 = vpop.permute.xlu0 %524
    %526 = vset.pattern.permute.xlu0 0
    %527 = vperm.xlu0 %526, %v492
    %v528 = vpop.permute.xlu0 %527
    %529 = vset.pattern.permute.xlu0 0
    %530 = vperm.xlu0 %529, %v493
    %v531 = vpop.permute.xlu0 %530
    %532 = vset.pattern.permute.xlu0 0
    %533 = vperm.xlu0 %532, %v494
    %v534 = vpop.permute.xlu0 %533
    %535 = vset.pattern.permute.xlu0 0
    %536 = vperm.xlu0 %535, %v495
    %v537 = vpop.permute.xlu0 %536
    %538 = vset.pattern.permute.xlu0 0
    %539 = vperm.xlu0 %538, %v496
    %v540 = vpop.permute.xlu0 %539
    %541 = vset.pattern.permute.xlu0 0
    %542 = vperm.xlu0 %541, %v497
    %v543 = vpop.permute.xlu0 %542
    %544 = vset.pattern.permute.xlu0 0
    %545 = vperm.xlu0 %544, %v498
    %v546 = vpop.permute.xlu0 %545
    %vm547 = vcmp.eq.s32.totalorder %v501, 1
    %vm548 = vcmp.eq.s32.totalorder %v504, 1
    %vm549 = vcmp.eq.s32.totalorder %v507, 1
    %vm550 = vcmp.eq.s32.totalorder %v510, 1
    %vm551 = vcmp.eq.s32.totalorder %v513, 1
    %vm552 = vcmp.eq.s32.totalorder %v516, 1
    %vm553 = vcmp.eq.s32.totalorder %v519, 1
    %vm554 = vcmp.eq.s32.totalorder %v522, 1
    %vm555 = vcmp.eq.s32.totalorder %v525, 1
    %vm556 = vcmp.eq.s32.totalorder %v528, 1
    %vm557 = vcmp.eq.s32.totalorder %v531, 1
    %vm558 = vcmp.eq.s32.totalorder %v534, 1
    %vm559 = vcmp.eq.s32.totalorder %v537, 1
    %vm560 = vcmp.eq.s32.totalorder %v540, 1
    %vm561 = vcmp.eq.s32.totalorder %v543, 1
    %vm562 = vcmp.eq.s32.totalorder %v546, 1
    %v563 = vsel %vm547, %v270, %v381
    %v564 = vsel %vm548, %v274, %v384
    %v565 = vsel %vm549, %v280, %v389
    %v566 = vsel %vm550, %v284, %v392
    %v567 = vsel %vm551, %v290, %v397
    %v568 = vsel %vm552, %v294, %v400
    %v569 = vsel %vm553, %v300, %v405
    %v570 = vsel %vm554, %v304, %v408
    %v571 = vsel %vm555, %v310, %v413
    %v572 = vsel %vm556, %v314, %v416
    %v573 = vsel %vm557, %v320, %v421
    %v574 = vsel %vm558, %v324, %v424
    %v575 = vsel %vm559, %v330, %v429
    %v576 = vsel %vm560, %v334, %v432
    %v577 = vsel %vm561, %v340, %v437
    %v578 = vsel %vm562, %v344, %v440
    %v579 = vld [vmem:[%s2] sm:$0xff]
    %580 = vmatprep.subr.mxu0 0.0
    %581 = vmatpush1.xpose.msra.mxu0 %v64
    %582 = vmatprep.subr.mxu0 0.0
    %583 = vmatpush1.xpose.msra.mxu0 %v63
    %584 = vmatprep.subr.mxu0 0.0
    %585 = vmatpush1.xpose.msra.mxu0 %v62
    %586 = vmatprep.subr.mxu0 0.0
    %587 = vmatpush1.xpose.msra.mxu0 %v61
    %588 = vmatprep.subr.mxu0 0.0
    %589 = vmatpush1.xpose.msra.mxu0 %v60
    %590 = vmatprep.subr.mxu0 0.0
    %591 = vmatpush1.xpose.msra.mxu0 %v59
    %592 = vmatprep.subr.mxu0 0.0
    %593 = vmatpush1.xpose.msra.mxu0 %v58
    %594 = vmatprep.subr.mxu0 0.0
    %595 = vmatpush1.xpose.msra.mxu0 %v57
    %596 = vmatprep.subr.mxu0 0.0
    %597 = vmatpush1.xpose.msra.mxu0 %v56
    %598 = vmatprep.subr.mxu0 0.0
    %599 = vmatpush1.xpose.msra.mxu0 %v55
    %600 = vmatprep.subr.mxu0 0.0
    %601 = vmatpush1.xpose.msra.mxu0 %v54
    %602 = vmatprep.subr.mxu0 0.0
    %603 = vmatpush1.xpose.msra.mxu0 %v53
    %604 = vmatprep.subr.mxu0 0.0
    %605 = vmatpush1.xpose.msra.mxu0 %v52
    %606 = vmatprep.subr.mxu0 0.0
    %607 = vmatpush1.xpose.msra.mxu0 %v51
    %608 = vmatprep.subr.mxu0 0.0
    %609 = vmatpush1.xpose.msra.mxu0 %v50
    %610 = vmatprep.subr.mxu0 0.0
    %611 = vmatpush1.xpose.msra.mxu0 %v49
    %612 = vmatprep.subr.mxu0 0.0
    %613 = vmatpush2.xpose.msra.mxu0 0.0
    %614 = vmatprep.subr.mxu0 0.0
    %615 = vmatpush2.xpose.msra.mxu0 0.0
    %616 = vmatprep.subr.mxu0 0.0
    %617 = vmatpush2.xpose.msra.mxu0 0.0
    %618 = vmatprep.subr.mxu0 0.0
    %619 = vmatpush2.xpose.msra.mxu0 0.0
    %620 = vmatprep.subr.mxu0 0.0
    %621 = vmatpush2.xpose.msra.mxu0 0.0
    %622 = vmatprep.subr.mxu0 0.0
    %623 = vmatpush2.xpose.msra.mxu0 0.0
    %624 = vmatprep.subr.mxu0 0.0
    %625 = vmatpush2.xpose.msra.mxu0 0.0
    %626 = vmatprep.subr.mxu0 0.0
    %627 = vmatpush2.xpose.msra.mxu0 0.0
    %628 = vmatprep.subr.mxu0 0.0
    %629 = vmatpush2.xpose.msra.mxu0 0.0
    %630 = vmatprep.subr.mxu0 0.0
    %631 = vmatpush2.xpose.msra.mxu0 0.0
    %632 = vmatprep.subr.mxu0 0.0
    %633 = vmatpush2.xpose.msra.mxu0 0.0
    %634 = vmatprep.subr.mxu0 0.0
    %635 = vmatpush2.xpose.msra.mxu0 0.0
    %636 = vmatprep.subr.mxu0 0.0
    %637 = vmatpush2.xpose.msra.mxu0 0.0
    %638 = vmatprep.subr.mxu0 0.0
    %639 = vmatpush2.xpose.msra.mxu0 0.0
    %640 = vmatprep.subr.mxu0 0.0
    %641 = vmatpush2.xpose.msra.mxu0 0.0
    %642 = vmatprep.subr.mxu0 0.0
    %643 = vmatpush2.xpose.msra.mxu0 0.0
    %644 = vmatprep.mubr.f32.mxu0 0.0
    %645 = vmatmul.mubr.f32.gmra.mxu0 %v579
    %v646 = vpop.f32.mrf.mxu0
    %v647 = vadd.f32 0.0, %v646
    %v648 = vpop.f32.mrf.mxu0
    %649 = vdwg.mxu0
    %v650 = vld [vmem:[%s3] sm:$0x1]
    %v651 = vlaneseq
    %v652 = vshrl.u32 %v651, 7
    %v653 = vsub.s32 0, %v652
    %v654 = vrot.slane %v650, %v653
    %v655 = vmul.f32 %v49, %v654
    %v656 = vmul.f32 %v50, %v654
    %v657 = vmul.f32 %v51, %v654
    %v658 = vmul.f32 %v52, %v654
    %v659 = vmul.f32 %v53, %v654
    %v660 = vmul.f32 %v54, %v654
    %v661 = vmul.f32 %v55, %v654
    %v662 = vmul.f32 %v56, %v654
    %v663 = vmul.f32 %v57, %v654
    %v664 = vmul.f32 %v58, %v654
    %v665 = vmul.f32 %v59, %v654
    %v666 = vmul.f32 %v60, %v654
    %v667 = vmul.f32 %v61, %v654
    %v668 = vmul.f32 %v62, %v654
    %v669 = vmul.f32 %v63, %v654
    %v670 = vmul.f32 %v64, %v654
    %671 = vadd.xlane.f32.xlu0 %v655
    %v672 = vpop.xlane.xlu0 %671
    %673 = vadd.xlane.f32.xlu0 %v656
    %v674 = vpop.xlane.xlu0 %673
    %675 = vadd.xlane.f32.xlu0 %v657
    %v676 = vpop.xlane.xlu0 %675
    %677 = vadd.xlane.f32.xlu0 %v658
    %v678 = vpop.xlane.xlu0 %677
    %679 = vadd.xlane.f32.xlu0 %v659
    %v680 = vpop.xlane.xlu0 %679
    %681 = vadd.xlane.f32.xlu0 %v660
    %v682 = vpop.xlane.xlu0 %681
    %683 = vadd.xlane.f32.xlu0 %v661
    %v684 = vpop.xlane.xlu0 %683
    %685 = vadd.xlane.f32.xlu0 %v662
    %v686 = vpop.xlane.xlu0 %685
    %687 = vadd.xlane.f32.xlu0 %v663
    %v688 = vpop.xlane.xlu0 %687
    %689 = vadd.xlane.f32.xlu0 %v664
    %v690 = vpop.xlane.xlu0 %689
    %691 = vadd.xlane.f32.xlu0 %v665
    %v692 = vpop.xlane.xlu0 %691
    %693 = vadd.xlane.f32.xlu0 %v666
    %v694 = vpop.xlane.xlu0 %693
    %695 = vadd.xlane.f32.xlu0 %v667
    %v696 = vpop.xlane.xlu0 %695
    %697 = vadd.xlane.f32.xlu0 %v668
    %v698 = vpop.xlane.xlu0 %697
    %699 = vadd.xlane.f32.xlu0 %v669
    %v700 = vpop.xlane.xlu0 %699
    %701 = vadd.xlane.f32.xlu0 %v670
    %v702 = vpop.xlane.xlu0 %701
    %v703 = vld [vmem:[#allocation2] sm:$0x1]
    %v705 = vlaneseq
    %v706 = vshrl.u32 %v705, 7
    %v707 = vsub.s32 0, %v706
    %v708 = vrot.slane %v703, %v707
    %v710 = vadd.f32 %v672, %v708
    %v711 = vadd.f32 %v674, %v708
    %v712 = vadd.f32 %v676, %v708
    %v713 = vadd.f32 %v678, %v708
    %v714 = vadd.f32 %v680, %v708
    %v715 = vadd.f32 %v682, %v708
    %v716 = vadd.f32 %v684, %v708
    %v717 = vadd.f32 %v686, %v708
    %v718 = vadd.f32 %v688, %v708
    %v719 = vadd.f32 %v690, %v708
    %v720 = vadd.f32 %v692, %v708
    %v721 = vadd.f32 %v694, %v708
    %v722 = vadd.f32 %v696, %v708
    %v723 = vadd.f32 %v698, %v708
    %v724 = vadd.f32 %v700, %v708
    %v725 = vadd.f32 %v702, %v708
    %727 = vset.pattern.permute.xlu0 0
    %728 = vperm.xlu0 %727, %v710
    %v729 = vpop.permute.xlu0 %728
    %732 = vset.pattern.permute.xlu0 0
    %733 = vperm.xlu0 %732, %v711
    %v734 = vpop.permute.xlu0 %733
    %737 = vset.pattern.permute.xlu0 0
    %738 = vperm.xlu0 %737, %v712
    %v739 = vpop.permute.xlu0 %738
    %742 = vset.pattern.permute.xlu0 0
    %743 = vperm.xlu0 %742, %v713
    %v744 = vpop.permute.xlu0 %743
    %747 = vset.pattern.permute.xlu0 0
    %748 = vperm.xlu0 %747, %v714
    %v749 = vpop.permute.xlu0 %748
    %752 = vset.pattern.permute.xlu0 0
    %753 = vperm.xlu0 %752, %v715
    %v754 = vpop.permute.xlu0 %753
    %757 = vset.pattern.permute.xlu0 0
    %758 = vperm.xlu0 %757, %v716
    %v759 = vpop.permute.xlu0 %758
    %762 = vset.pattern.permute.xlu0 0
    %763 = vperm.xlu0 %762, %v717
    %v764 = vpop.permute.xlu0 %763
    %767 = vset.pattern.permute.xlu0 0
    %768 = vperm.xlu0 %767, %v718
    %v769 = vpop.permute.xlu0 %768
    %772 = vset.pattern.permute.xlu0 0
    %773 = vperm.xlu0 %772, %v719
    %v774 = vpop.permute.xlu0 %773
    %777 = vset.pattern.permute.xlu0 0
    %778 = vperm.xlu0 %777, %v720
    %v779 = vpop.permute.xlu0 %778
    %782 = vset.pattern.permute.xlu0 0
    %783 = vperm.xlu0 %782, %v721
    %v784 = vpop.permute.xlu0 %783
    %787 = vset.pattern.permute.xlu0 0
    %788 = vperm.xlu0 %787, %v722
    %v789 = vpop.permute.xlu0 %788
    %792 = vset.pattern.permute.xlu0 0
    %793 = vperm.xlu0 %792, %v723
    %v794 = vpop.permute.xlu0 %793
    %797 = vset.pattern.permute.xlu0 0
    %798 = vperm.xlu0 %797, %v724
    %v799 = vpop.permute.xlu0 %798
    %802 = vset.pattern.permute.xlu0 0
    %803 = vperm.xlu0 %802, %v725
    %v804 = vpop.permute.xlu0 %803
    %v806 = vlaneseq
    %v807 = vshrl.u32 %v806, 7
    %v808 = vsub.s32 0, %v807
    %v809 = vrot.slane %v647, %v808
    %v810 = vadd.f32 %v729, %v809
    %v811 = vadd.f32 %v734, %v809
    %v812 = vadd.f32 %v739, %v809
    %v813 = vadd.f32 %v744, %v809
    %v814 = vadd.f32 %v749, %v809
    %v815 = vadd.f32 %v754, %v809
    %v816 = vadd.f32 %v759, %v809
    %v817 = vadd.f32 %v764, %v809
    %v818 = vadd.f32 %v769, %v809
    %v819 = vadd.f32 %v774, %v809
    %v820 = vadd.f32 %v779, %v809
    %v821 = vadd.f32 %v784, %v809
    %v822 = vadd.f32 %v789, %v809
    %v823 = vadd.f32 %v794, %v809
    %v824 = vadd.f32 %v799, %v809
    %v825 = vadd.f32 %v804, %v809
    %v826 = vmax.f32 %v810, 0.0
    %v827 = vmax.f32 %v811, 0.0
    %v828 = vmax.f32 %v812, 0.0
    %v829 = vmax.f32 %v813, 0.0
    %v830 = vmax.f32 %v814, 0.0
    %v831 = vmax.f32 %v815, 0.0
    %v832 = vmax.f32 %v816, 0.0
    %v833 = vmax.f32 %v817, 0.0
    %v834 = vmax.f32 %v818, 0.0
    %v835 = vmax.f32 %v819, 0.0
    %v836 = vmax.f32 %v820, 0.0
    %v837 = vmax.f32 %v821, 0.0
    %v838 = vmax.f32 %v822, 0.0
    %v839 = vmax.f32 %v823, 0.0
    %v840 = vmax.f32 %v824, 0.0
    %v841 = vmax.f32 %v825, 0.0
    %v842 = vmul.f32 %v826, 0.5
    %v843 = vmul.f32 %v827, 0.5
    %v844 = vmul.f32 %v828, 0.5
    %v845 = vmul.f32 %v829, 0.5
    %v846 = vmul.f32 %v830, 0.5
    %v847 = vmul.f32 %v831, 0.5
    %v848 = vmul.f32 %v832, 0.5
    %v849 = vmul.f32 %v833, 0.5
    %v850 = vmul.f32 %v834, 0.5
    %v851 = vmul.f32 %v835, 0.5
    %v852 = vmul.f32 %v836, 0.5
    %v853 = vmul.f32 %v837, 0.5
    %v854 = vmul.f32 %v838, 0.5
    %v855 = vmul.f32 %v839, 0.5
    %v856 = vmul.f32 %v840, 0.5
    %v857 = vmul.f32 %v841, 0.5
    %v858 = vtanh.pop %v842
    %v859 = vtanh.pop %v843
    %v860 = vtanh.pop %v844
    %v861 = vtanh.pop %v845
    %v862 = vtanh.pop %v846
    %v863 = vtanh.pop %v847
    %v864 = vtanh.pop %v848
    %v865 = vtanh.pop %v849
    %v866 = vtanh.pop %v850
    %v867 = vtanh.pop %v851
    %v868 = vtanh.pop %v852
    %v869 = vtanh.pop %v853
    %v870 = vtanh.pop %v854
    %v871 = vtanh.pop %v855
    %v872 = vtanh.pop %v856
    %v873 = vtanh.pop %v857
    %v874 = vmul.f32 %v858, 0.5
    %v875 = vmul.f32 %v859, 0.5
    %v876 = vmul.f32 %v860, 0.5
    %v877 = vmul.f32 %v861, 0.5
    %v878 = vmul.f32 %v862, 0.5
    %v879 = vmul.f32 %v863, 0.5
    %v880 = vmul.f32 %v864, 0.5
    %v881 = vmul.f32 %v865, 0.5
    %v882 = vmul.f32 %v866, 0.5
    %v883 = vmul.f32 %v867, 0.5
    %v884 = vmul.f32 %v868, 0.5
    %v885 = vmul.f32 %v869, 0.5
    %v886 = vmul.f32 %v870, 0.5
    %v887 = vmul.f32 %v871, 0.5
    %v888 = vmul.f32 %v872, 0.5
    %v889 = vmul.f32 %v873, 0.5
    %v890 = vadd.f32 %v874, 0.5
    %v891 = vadd.f32 %v875, 0.5
    %v892 = vadd.f32 %v876, 0.5
    %v893 = vadd.f32 %v877, 0.5
    %v894 = vadd.f32 %v878, 0.5
    %v895 = vadd.f32 %v879, 0.5
    %v896 = vadd.f32 %v880, 0.5
    %v897 = vadd.f32 %v881, 0.5
    %v898 = vadd.f32 %v882, 0.5
    %v899 = vadd.f32 %v883, 0.5
    %v900 = vadd.f32 %v884, 0.5
    %v901 = vadd.f32 %v885, 0.5
    %v902 = vadd.f32 %v886, 0.5
    %v903 = vadd.f32 %v887, 0.5
    %v904 = vadd.f32 %v888, 0.5
    %v905 = vadd.f32 %v889, 0.5
    %v906 = vld [vmem:[%s7] sm:$0xff]
    %v907 = vld [vmem:[%s7 + $0x8] sm:$0xff]
    %v908 = vld [vmem:[%s7 + $0x10] sm:$0xff]
    %v909 = vld [vmem:[%s7 + $0x18] sm:$0xff]
    %vm910 = vnez %v906
    %vm911 = vnez %v907
    %vm912 = vnez %v908
    %vm913 = vnez %v909
    %v914 = vsel %vm910, 16843009, 0
    %v915 = vsel %vm911, 16843009, 0
    %v916 = vsel %vm912, 16843009, 0
    %v917 = vsel %vm913, 16843009, 0
    %v918 = vunpack.c.0.s8 %v914
    %v919 = vunpack.c.1.s8 %v914
    %v920 = vunpack.c.2.s8 %v914
    %v921 = vunpack.c.3.s8 %v914
    %v922 = vunpack.c.0.s8 %v915
    %v923 = vunpack.c.1.s8 %v915
    %v924 = vunpack.c.2.s8 %v915
    %v925 = vunpack.c.3.s8 %v915
    %v926 = vunpack.c.0.s8 %v916
    %v927 = vunpack.c.1.s8 %v916
    %v928 = vunpack.c.2.s8 %v916
    %v929 = vunpack.c.3.s8 %v916
    %v930 = vunpack.c.0.s8 %v917
    %v931 = vunpack.c.1.s8 %v917
    %v932 = vunpack.c.2.s8 %v917
    %v933 = vunpack.c.3.s8 %v917
    %v934 = vpack.c.b16 %v918, %v918
    %v935 = vpack.c.b8 %v934, %v934
    %v936 = vpack.c.b16 %v919, %v919
    %v937 = vpack.c.b8 %v936, %v936
    %v938 = vpack.c.b16 %v920, %v920
    %v939 = vpack.c.b8 %v938, %v938
    %v940 = vpack.c.b16 %v921, %v921
    %v941 = vpack.c.b8 %v940, %v940
    %v942 = vpack.c.b16 %v922, %v922
    %v943 = vpack.c.b8 %v942, %v942
    %v944 = vpack.c.b16 %v923, %v923
    %v945 = vpack.c.b8 %v944, %v944
    %v946 = vpack.c.b16 %v924, %v924
    %v947 = vpack.c.b8 %v946, %v946
    %v948 = vpack.c.b16 %v925, %v925
    %v949 = vpack.c.b8 %v948, %v948
    %v950 = vpack.c.b16 %v926, %v926
    %v951 = vpack.c.b8 %v950, %v950
    %v952 = vpack.c.b16 %v927, %v927
    %v953 = vpack.c.b8 %v952, %v952
    %v954 = vpack.c.b16 %v928, %v928
    %v955 = vpack.c.b8 %v954, %v954
    %v956 = vpack.c.b16 %v929, %v929
    %v957 = vpack.c.b8 %v956, %v956
    %v958 = vpack.c.b16 %v930, %v930
    %v959 = vpack.c.b8 %v958, %v958
    %v960 = vpack.c.b16 %v931, %v931
    %v961 = vpack.c.b8 %v960, %v960
    %v962 = vpack.c.b16 %v932, %v932
    %v963 = vpack.c.b8 %v962, %v962
    %v964 = vpack.c.b16 %v933, %v933
    %v965 = vpack.c.b8 %v964, %v964
    %vm966 = vnez %v935
    %vm967 = vnez %v937
    %vm968 = vnez %v939
    %vm969 = vnez %v941
    %vm970 = vnez %v943
    %vm971 = vnez %v945
    %vm972 = vnez %v947
    %vm973 = vnez %v949
    %vm974 = vnez %v951
    %vm975 = vnez %v953
    %vm976 = vnez %v955
    %vm977 = vnez %v957
    %vm978 = vnez %v959
    %vm979 = vnez %v961
    %vm980 = vnez %v963
    %vm981 = vnez %v965
    %v982 = vsel %vm966, 16843009, 0
    %v983 = vsel %vm967, 16843009, 0
    %v984 = vsel %vm968, 16843009, 0
    %v985 = vsel %vm969, 16843009, 0
    %v986 = vsel %vm970, 16843009, 0
    %v987 = vsel %vm971, 16843009, 0
    %v988 = vsel %vm972, 16843009, 0
    %v989 = vsel %vm973, 16843009, 0
    %v990 = vsel %vm974, 16843009, 0
    %v991 = vsel %vm975, 16843009, 0
    %v992 = vsel %vm976, 16843009, 0
    %v993 = vsel %vm977, 16843009, 0
    %v994 = vsel %vm978, 16843009, 0
    %v995 = vsel %vm979, 16843009, 0
    %v996 = vsel %vm980, 16843009, 0
    %v997 = vsel %vm981, 16843009, 0
    %v998 = vunpack.c.0.s8 %v982
    %v999 = vunpack.c.0.s8 %v983
    %v1000 = vunpack.c.0.s8 %v984
    %v1001 = vunpack.c.0.s8 %v985
    %v1002 = vunpack.c.0.s8 %v986
    %v1003 = vunpack.c.0.s8 %v987
    %v1004 = vunpack.c.0.s8 %v988
    %v1005 = vunpack.c.0.s8 %v989
    %v1006 = vunpack.c.0.s8 %v990
    %v1007 = vunpack.c.0.s8 %v991
    %v1008 = vunpack.c.0.s8 %v992
    %v1009 = vunpack.c.0.s8 %v993
    %v1010 = vunpack.c.0.s8 %v994
    %v1011 = vunpack.c.0.s8 %v995
    %v1012 = vunpack.c.0.s8 %v996
    %v1013 = vunpack.c.0.s8 %v997
    %vm1014 = vcmp.ne.s32.totalorder %v998, 0
    %vm1015 = vcmp.ne.s32.totalorder %v999, 0
    %vm1016 = vcmp.ne.s32.totalorder %v1000, 0
    %vm1017 = vcmp.ne.s32.totalorder %v1001, 0
    %vm1018 = vcmp.ne.s32.totalorder %v1002, 0
    %vm1019 = vcmp.ne.s32.totalorder %v1003, 0
    %vm1020 = vcmp.ne.s32.totalorder %v1004, 0
    %vm1021 = vcmp.ne.s32.totalorder %v1005, 0
    %vm1022 = vcmp.ne.s32.totalorder %v1006, 0
    %vm1023 = vcmp.ne.s32.totalorder %v1007, 0
    %vm1024 = vcmp.ne.s32.totalorder %v1008, 0
    %vm1025 = vcmp.ne.s32.totalorder %v1009, 0
    %vm1026 = vcmp.ne.s32.totalorder %v1010, 0
    %vm1027 = vcmp.ne.s32.totalorder %v1011, 0
    %vm1028 = vcmp.ne.s32.totalorder %v1012, 0
    %vm1029 = vcmp.ne.s32.totalorder %v1013, 0
    %v1030 = vsel %vm1014, %v890, 0.0
    %v1031 = vsel %vm1015, %v891, 0.0
    %v1032 = vsel %vm1016, %v892, 0.0
    %v1033 = vsel %vm1017, %v893, 0.0
    %v1034 = vsel %vm1018, %v894, 0.0
    %v1035 = vsel %vm1019, %v895, 0.0
    %v1036 = vsel %vm1020, %v896, 0.0
    %v1037 = vsel %vm1021, %v897, 0.0
    %v1038 = vsel %vm1022, %v898, 0.0
    %v1039 = vsel %vm1023, %v899, 0.0
    %v1040 = vsel %vm1024, %v900, 0.0
    %v1041 = vsel %vm1025, %v901, 0.0
    %v1042 = vsel %vm1026, %v902, 0.0
    %v1043 = vsel %vm1027, %v903, 0.0
    %v1044 = vsel %vm1028, %v904, 0.0
    %v1045 = vsel %vm1029, %v905, 0.0
    %v1046 = vpack.c.bf16 %v1031, %v1030
    %v1047 = vpack.c.bf16 %v1033, %v1032
    %v1048 = vpack.c.bf16 %v1035, %v1034
    %v1049 = vpack.c.bf16 %v1037, %v1036
    %v1050 = vpack.c.bf16 %v1039, %v1038
    %v1051 = vpack.c.bf16 %v1041, %v1040
    %v1052 = vpack.c.bf16 %v1043, %v1042
    %v1053 = vpack.c.bf16 %v1045, %v1044
    %1054 = vmatprep.subr.bf16.mxu0 0
    %1055 = vmatpush1.bf16.msra.mxu0 %v450
    %1056 = vmatprep.subr.bf16.mxu0 0
    %1057 = vmatpush1.bf16.msra.mxu0 %v449
    %1058 = vmatprep.subr.bf16.mxu0 0
    %1059 = vmatpush1.bf16.msra.mxu0 %v448
    %1060 = vmatprep.subr.bf16.mxu0 0
    %1061 = vmatpush1.bf16.msra.mxu0 %v447
    %1062 = vmatprep.subr.bf16.mxu0 0
    %1063 = vmatpush1.bf16.msra.mxu0 %v446
    %1064 = vmatprep.subr.bf16.mxu0 0
    %1065 = vmatpush1.bf16.msra.mxu0 %v445
    %1066 = vmatprep.subr.bf16.mxu0 0
    %1067 = vmatpush1.bf16.msra.mxu0 %v444
    %1068 = vmatprep.subr.bf16.mxu0 0
    %1069 = vmatpush1.bf16.msra.mxu0 %v443
    %1070 = vmatprep.subr.bf16.mxu0 0
    %1071 = vmatpush2.bf16.msra.mxu0 0
    %1072 = vmatprep.subr.bf16.mxu0 0
    %1073 = vmatpush2.bf16.msra.mxu0 0
    %1074 = vmatprep.subr.bf16.mxu0 0
    %1075 = vmatpush2.bf16.msra.mxu0 0
    %1076 = vmatprep.subr.bf16.mxu0 0
    %1077 = vmatpush2.bf16.msra.mxu0 0
    %1078 = vmatprep.subr.bf16.mxu0 0
    %1079 = vmatpush2.bf16.msra.mxu0 0
    %1080 = vmatprep.subr.bf16.mxu0 0
    %1081 = vmatpush2.bf16.msra.mxu0 0
    %1082 = vmatprep.subr.bf16.mxu0 0
    %1083 = vmatpush2.bf16.msra.mxu0 0
    %1084 = vmatprep.subr.bf16.mxu0 0
    %1085 = vmatpush2.bf16.msra.mxu0 0
    %1086 = vmatprep.mubr.bf16.mxu0 0
    %1087 = vmatmul.mubr.bf16.gmra.mxu0 %v1046
    %v1088 = vpop.f32.mrf.mxu0
    %v1089 = vadd.f32 0.0, %v1088
    %v1090 = vpop.f32.mrf.mxu0
    %v1091 = vpop.f32.mrf.mxu0
    %v1092 = vadd.f32 0.0, %v1091
    %v1093 = vpop.f32.mrf.mxu0
    %1094 = vmatprep.mubr.bf16.mxu0 0
    %1095 = vmatmul.mubr.bf16.gmra.mxu0 %v1047
    %v1096 = vpop.f32.mrf.mxu0
    %v1097 = vadd.f32 0.0, %v1096
    %v1098 = vpop.f32.mrf.mxu0
    %v1099 = vpop.f32.mrf.mxu0
    %v1100 = vadd.f32 0.0, %v1099
    %v1101 = vpop.f32.mrf.mxu0
    %1102 = vmatprep.mubr.bf16.mxu0 0
    %1103 = vmatmul.mubr.bf16.gmra.mxu0 %v1048
    %v1104 = vpop.f32.mrf.mxu0
    %v1105 = vadd.f32 0.0, %v1104
    %v1106 = vpop.f32.mrf.mxu0
    %v1107 = vpop.f32.mrf.mxu0
    %v1108 = vadd.f32 0.0, %v1107
    %v1109 = vpop.f32.mrf.mxu0
    %1110 = vmatprep.mubr.bf16.mxu0 0
    %1111 = vmatmul.mubr.bf16.gmra.mxu0 %v1049
    %v1112 = vpop.f32.mrf.mxu0
    %v1113 = vadd.f32 0.0, %v1112
    %v1114 = vpop.f32.mrf.mxu0
    %v1115 = vpop.f32.mrf.mxu0
    %v1116 = vadd.f32 0.0, %v1115
    %v1117 = vpop.f32.mrf.mxu0
    %1118 = vmatprep.mubr.bf16.mxu0 0
    %1119 = vmatmul.mubr.bf16.gmra.mxu0 %v1050
    %v1120 = vpop.f32.mrf.mxu0
    %v1121 = vadd.f32 0.0, %v1120
    %v1122 = vpop.f32.mrf.mxu0
    %v1123 = vpop.f32.mrf.mxu0
    %v1124 = vadd.f32 0.0, %v1123
    %v1125 = vpop.f32.mrf.mxu0
    %1126 = vmatprep.mubr.bf16.mxu0 0
    %1127 = vmatmul.mubr.bf16.gmra.mxu0 %v1051
    %v1128 = vpop.f32.mrf.mxu0
    %v1129 = vadd.f32 0.0, %v1128
    %v1130 = vpop.f32.mrf.mxu0
    %v1131 = vpop.f32.mrf.mxu0
    %v1132 = vadd.f32 0.0, %v1131
    %v1133 = vpop.f32.mrf.mxu0
    %1134 = vmatprep.mubr.bf16.mxu0 0
    %1135 = vmatmul.mubr.bf16.gmra.mxu0 %v1052
    %v1136 = vpop.f32.mrf.mxu0
    %v1137 = vadd.f32 0.0, %v1136
    %v1138 = vpop.f32.mrf.mxu0
    %v1139 = vpop.f32.mrf.mxu0
    %v1140 = vadd.f32 0.0, %v1139
    %v1141 = vpop.f32.mrf.mxu0
    %1142 = vmatprep.mubr.bf16.mxu0 0
    %1143 = vmatmul.mubr.bf16.gmra.mxu0 %v1053
    %v1144 = vpop.f32.mrf.mxu0
    %v1145 = vadd.f32 0.0, %v1144
    %v1146 = vpop.f32.mrf.mxu0
    %v1147 = vpop.f32.mrf.mxu0
    %v1148 = vadd.f32 0.0, %v1147
    %v1149 = vpop.f32.mrf.mxu0
    %1150 = vdwg.mxu0
    %v1151 = vld [vmem:[%s6] sm:$0xff]
    %v1152 = vld [vmem:[%s6 + $0x8] sm:$0xff]
    %v1153 = vld [vmem:[%s6 + $0x10] sm:$0xff]
    %v1154 = vld [vmem:[%s6 + $0x18] sm:$0xff]
    %v1155 = vld [vmem:[%s6 + $0x20] sm:$0xff]
    %v1156 = vld [vmem:[%s6 + $0x28] sm:$0xff]
    %v1157 = vld [vmem:[%s6 + $0x30] sm:$0xff]
    %v1158 = vld [vmem:[%s6 + $0x38] sm:$0xff]
    %v1159 = vld [vmem:[%s6 + $0x40] sm:$0xff]
    %v1160 = vld [vmem:[%s6 + $0x48] sm:$0xff]
    %v1161 = vld [vmem:[%s6 + $0x50] sm:$0xff]
    %v1162 = vld [vmem:[%s6 + $0x58] sm:$0xff]
    %v1163 = vld [vmem:[%s6 + $0x60] sm:$0xff]
    %v1164 = vld [vmem:[%s6 + $0x68] sm:$0xff]
    %v1165 = vld [vmem:[%s6 + $0x70] sm:$0xff]
    %v1166 = vld [vmem:[%s6 + $0x78] sm:$0xff]
    %1168 = vset.pattern.permute.xlu0 0
    %1169 = vperm.xlu0 %1168, %v1151
    %v1170 = vpop.permute.xlu0 %1169
    %1173 = vset.pattern.permute.xlu0 0
    %1174 = vperm.xlu0 %1173, %v1152
    %v1175 = vpop.permute.xlu0 %1174
    %1178 = vset.pattern.permute.xlu0 0
    %1179 = vperm.xlu0 %1178, %v1153
    %v1180 = vpop.permute.xlu0 %1179
    %1183 = vset.pattern.permute.xlu0 0
    %1184 = vperm.xlu0 %1183, %v1154
    %v1185 = vpop.permute.xlu0 %1184
    %1188 = vset.pattern.permute.xlu0 0
    %1189 = vperm.xlu0 %1188, %v1155
    %v1190 = vpop.permute.xlu0 %1189
    %1193 = vset.pattern.permute.xlu0 0
    %1194 = vperm.xlu0 %1193, %v1156
    %v1195 = vpop.permute.xlu0 %1194
    %1198 = vset.pattern.permute.xlu0 0
    %1199 = vperm.xlu0 %1198, %v1157
    %v1200 = vpop.permute.xlu0 %1199
    %1203 = vset.pattern.permute.xlu0 0
    %1204 = vperm.xlu0 %1203, %v1158
    %v1205 = vpop.permute.xlu0 %1204
    %1208 = vset.pattern.permute.xlu0 0
    %1209 = vperm.xlu0 %1208, %v1159
    %v1210 = vpop.permute.xlu0 %1209
    %1213 = vset.pattern.permute.xlu0 0
    %1214 = vperm.xlu0 %1213, %v1160
    %v1215 = vpop.permute.xlu0 %1214
    %1218 = vset.pattern.permute.xlu0 0
    %1219 = vperm.xlu0 %1218, %v1161
    %v1220 = vpop.permute.xlu0 %1219
    %1223 = vset.pattern.permute.xlu0 0
    %1224 = vperm.xlu0 %1223, %v1162
    %v1225 = vpop.permute.xlu0 %1224
    %1228 = vset.pattern.permute.xlu0 0
    %1229 = vperm.xlu0 %1228, %v1163
    %v1230 = vpop.permute.xlu0 %1229
    %1233 = vset.pattern.permute.xlu0 0
    %1234 = vperm.xlu0 %1233, %v1164
    %v1235 = vpop.permute.xlu0 %1234
    %1238 = vset.pattern.permute.xlu0 0
    %1239 = vperm.xlu0 %1238, %v1165
    %v1240 = vpop.permute.xlu0 %1239
    %1243 = vset.pattern.permute.xlu0 0
    %1244 = vperm.xlu0 %1243, %v1166
    %v1245 = vpop.permute.xlu0 %1244
    %v1247 = vmul.f32 %v1089, %v1170
    %v1248 = vmul.f32 %v1092, %v1175
    %v1249 = vmul.f32 %v1097, %v1180
    %v1250 = vmul.f32 %v1100, %v1185
    %v1251 = vmul.f32 %v1105, %v1190
    %v1252 = vmul.f32 %v1108, %v1195
    %v1253 = vmul.f32 %v1113, %v1200
    %v1254 = vmul.f32 %v1116, %v1205
    %v1255 = vmul.f32 %v1121, %v1210
    %v1256 = vmul.f32 %v1124, %v1215
    %v1257 = vmul.f32 %v1129, %v1220
    %v1258 = vmul.f32 %v1132, %v1225
    %v1259 = vmul.f32 %v1137, %v1230
    %v1260 = vmul.f32 %v1140, %v1235
    %v1261 = vmul.f32 %v1145, %v1240
    %v1262 = vmul.f32 %v1148, %v1245
    %v1263 = vadd.f32 %v1247, %v563
    %v1264 = vadd.f32 %v1248, %v564
    %v1265 = vadd.f32 %v1249, %v565
    %v1266 = vadd.f32 %v1250, %v566
    %v1267 = vadd.f32 %v1251, %v567
    %v1268 = vadd.f32 %v1252, %v568
    %v1269 = vadd.f32 %v1253, %v569
    %v1270 = vadd.f32 %v1254, %v570
    %v1271 = vadd.f32 %v1255, %v571
    %v1272 = vadd.f32 %v1256, %v572
    %v1273 = vadd.f32 %v1257, %v573
    %v1274 = vadd.f32 %v1258, %v574
    %v1275 = vadd.f32 %v1259, %v575
    %v1276 = vadd.f32 %v1260, %v576
    %v1277 = vadd.f32 %v1261, %v577
    %v1278 = vadd.f32 %v1262, %v578
    %v1279 = vtanh.pop %v1263
    %v1280 = vtanh.pop %v1264
    %v1281 = vtanh.pop %v1265
    %v1282 = vtanh.pop %v1266
    %v1283 = vtanh.pop %v1267
    %v1284 = vtanh.pop %v1268
    %v1285 = vtanh.pop %v1269
    %v1286 = vtanh.pop %v1270
    %v1287 = vtanh.pop %v1271
    %v1288 = vtanh.pop %v1272
    %v1289 = vtanh.pop %v1273
    %v1290 = vtanh.pop %v1274
    %v1291 = vtanh.pop %v1275
    %v1292 = vtanh.pop %v1276
    %v1293 = vtanh.pop %v1277
    %v1294 = vtanh.pop %v1278
    %1295 = vst [vmem:[#allocation6] sm:$0xff] %v1279
    %1296 = vst [vmem:[#allocation6 + $0x8] sm:$0xff] %v1280
    %1297 = vst [vmem:[#allocation6 + $0x10] sm:$0xff] %v1281
    %1298 = vst [vmem:[#allocation6 + $0x18] sm:$0xff] %v1282
    %1299 = vst [vmem:[#allocation6 + $0x20] sm:$0xff] %v1283
    %1300 = vst [vmem:[#allocation6 + $0x28] sm:$0xff] %v1284
    %1301 = vst [vmem:[#allocation6 + $0x30] sm:$0xff] %v1285
    %1302 = vst [vmem:[#allocation6 + $0x38] sm:$0xff] %v1286
    %1303 = vst [vmem:[#allocation6 + $0x40] sm:$0xff] %v1287
    %1304 = vst [vmem:[#allocation6 + $0x48] sm:$0xff] %v1288
    %1305 = vst [vmem:[#allocation6 + $0x50] sm:$0xff] %v1289
    %1306 = vst [vmem:[#allocation6 + $0x58] sm:$0xff] %v1290
    %1307 = vst [vmem:[#allocation6 + $0x60] sm:$0xff] %v1291
    %1308 = vst [vmem:[#allocation6 + $0x68] sm:$0xff] %v1292
    %1309 = vst [vmem:[#allocation6 + $0x70] sm:$0xff] %v1293
    %1310 = vst [vmem:[#allocation6 + $0x78] sm:$0xff] %v1294
    // Predicated region
    $region38: #{tpu_custom_call.1} parent=1 // pred_check
      _
    $region39: #{tpu_custom_call.1} parent=1 // pred_check_branch
      %1312 = sbr.rel (0) target = $region41
    $region40: #{tpu_custom_call.1} parent=1 // pred_region
      %s1314 = ssub.s32 2048, 2048
      %1315 = vsyncadd [#allocation5], %s1314
      %s1316 = sshll.u32 [#allocation6], 4
      %s1317 = int_to_ptr.vmem [resolvable:$true] %s1316
      %1322 = dma.vmem_to_hbm [thread:$0]  %s1317, 2048, %s8, [#allocation5], 128, 128, 8
    $region41: #{tpu_custom_call.1} parent=1 // pred_fallthru
      _
    // Predicated region
    $region42: #{tpu_custom_call.1} parent=1 // pred_check
      _
    $region43: #{tpu_custom_call.1} parent=1 // pred_check_branch
      %1324 = sbr.rel (0) target = $region45
    $region44: #{tpu_custom_call.1} parent=1 // pred_region
      %1325 = dma.done [#allocation5], 2048
    $region45: #{tpu_custom_call.1} parent=1 // pred_fallthru
      _
    %1326 = vsyncpa [#allocation4], 1
    %1327 = vsyncpa [#allocation5], 1

</llo_original>
